<compile_context>
chip_gen: v7x
topology: tpu7x:2x2x1
jax: 0.10.0
libtpu: 0.0.40
codegen_flags: <defaults>
</compile_context>

<pallas_src>
import jax
import jax.numpy as jnp
from jax import lax
from jax.experimental import pallas as pl
from jax.experimental.pallas import tpu as pltpu

# Small but structurally faithful hyper-parameters (module defaults scaled down)
IN_DIM  = 21        # input_dim (amino-acid feature width)
H1 = H2 = 128       # hidden_dims (scaled down from [1024, 1024])
MLP_HID = H2        # mlp_hid_channels = -1  -> hidden_dims[-1]
OUT_DIM = 1         # out_channels
KSIZE   = 5         # kernel_size
PAD     = 2         # padding
B       = 8         # proteins per batch (multiple of 8 for sublane alignment)
L       = 16        # residues per protein (dense, equal-length batch; power of 2
                    # so the tree max-readout folds evenly)
# TODO(synk): torchdrug packs variadic-length sequences; here we assume a dense
#             equal-length batch so the per-graph max readout is a plain max over L.
assert L & (L - 1) == 0, "tree max readout assumes power-of-two sequence length"

NPAIR     = (KSIZE + 1) // 2         # conv2 taps fused in pairs (zero-padded to 2*NPAIR)
KP        = 128                      # lane-padded im2col contraction depth for conv1
LB        = L * B                    # rows of every activation slab (row = l*B + b)
PB        = PAD * B                  # top halo rows
PAD1_ROWS = (2 * NPAIR - 1) * B + LB # 168: last (phantom) tap window reads rows [40,168);
#   its weights are zero, so those halo rows must read zeros (never garbage).


def cnn_mlp_kernel(x_ref, w1_ref, b1_ref, w2_ref, b2_ref,
                   w3_ref, b3_ref, w4t_ref, b4_ref,
                   out_ref, pad1_ref, acc2_ref):
    """Fused Conv1d+ReLU -> Conv1d+ReLU -> max readout -> Linear+ReLU -> Linear."""
    p = pl.program_id(0)

    # ---- grid step 0: conv1 as a single im2col matmul, stage bf16 h1 ----------
    @pl.when(p == 0)
    def _init():
        acc1 = jnp.dot(x_ref[...], w1_ref[...],
                       preferred_element_type=jnp.float32)          # (LB, H1) f32
        h1 = jnp.maximum(acc1 + b1_ref[...], 0.0)
        # zero ONLY the halo rows; the interior is written exactly once
        pad1_ref[0:PB] = jnp.zeros((PB, H1), jnp.bfloat16)
        pad1_ref[PB:PB + LB] = h1.astype(jnp.bfloat16)
        pad1_ref[PB + LB:] = jnp.zeros((PAD1_ROWS - PB - LB, H1), jnp.bfloat16)
        # initialize the conv2 accumulator with the broadcast bias
        acc2_ref[...] = jnp.broadcast_to(b2_ref[...], (LB, H2))

    # ---- conv2: one fused pair of taps per grid step (2*H1 = 256-deep MXU push)
    i0 = pl.multiple_of(2 * p * B, 2 * B)        # even tap: 16-row aligned
    i1 = pl.multiple_of((2 * p + 1) * B, B)      # odd tap:   8-row aligned
    win = jnp.concatenate(
        [pad1_ref[pl.ds(i0, LB)], pad1_ref[pl.ds(i1, LB)]], axis=-1)  # (LB, 2*H1) bf16
    acc2_ref[...] += jnp.dot(win, w2_ref[0],
                             preferred_element_type=jnp.float32)

    # ---- last grid step: max readout over residues, ReLU, MLP head ------------
    @pl.when(p == pl.num_programs(0) - 1)
    def _finalize():
        # Max readout over residues as a log-depth tree fold.  Rows are l*B + b,
        # so folding halves (sizes stay multiples of B) keeps per-protein
        # alignment; ReLU commutes with max, so clamp once on the (B, H2) result.
        g = acc2_ref[...]                                             # (LB, H2) f32
        n = LB
        while n > B:                                                  # static: 4 levels
            n //= 2
            g = jnp.maximum(g[:n], g[n:2 * n])
        g = jnp.maximum(g, 0.0)                                       # (B, H2)
        # TODO(synk): nn.Dropout(p=0.5) is train-time only; eval semantics == identity.
        m1 = jnp.maximum(
            jnp.dot(g.astype(jnp.bfloat16), w3_ref[...],
                    preferred_element_type=jnp.float32) + b3_ref[...], 0.0)
        # final (H2 -> 1) layer: VPU multiply + lane reduce (MXU is wasted at N=1)
        out_ref[...] = jnp.sum(m1 * w4t_ref[...], axis=-1, keepdims=True) + b4_ref[...]


def cnn_mlp_forward(x_blc, params):
    """x_blc: (B, L, IN_DIM) dense protein node features. Returns (B, OUT_DIM)."""
    w1, b1, w2, b2, w3, b3, w4, b4 = params
    bf = jnp.bfloat16

    # --- wrapper-side layout plumbing (pure data movement, no arithmetic) ------
    # conv1 im2col: (B, L, Cin) -> sequence-major (L*B, K*Cin) slab, lane-pad to KP
    x_pad = jnp.pad(x_blc, ((0, 0), (PAD, PAD), (0, 0)))              # (B, L+2P, Cin)
    taps = [x_pad[:, k:k + L, :] for k in range(KSIZE)]               # K x (B, L, Cin)
    x_slab = jnp.concatenate(taps, axis=-1)                           # (B, L, K*Cin)
    x_slab = jnp.transpose(x_slab, (1, 0, 2)).reshape(LB, KSIZE * IN_DIM)
    x_slab = jnp.pad(x_slab, ((0, 0), (0, KP - KSIZE * IN_DIM))).astype(bf)

    w1_flat = jnp.pad(w1.reshape(KSIZE * IN_DIM, H1),
                      ((0, KP - KSIZE * IN_DIM), (0, 0))).astype(bf)  # (KP, H1)

    # conv2 weights: zero-pad to an even tap count and fuse pairs -> (NPAIR, 2*H1, H2)
    w2_pad = jnp.concatenate(
        [w2, jnp.zeros((2 * NPAIR - KSIZE, H1, H2), w2.dtype)], axis=0)
    w2_pairs = w2_pad.reshape(NPAIR, 2 * H1, H2).astype(bf)

    w3_bf = w3.astype(bf)
    w4_t = jnp.transpose(w4)                                          # (1, MLP_HID) f32

    def const(shape):
        return pl.BlockSpec(shape, lambda p, _n=len(shape): (0,) * _n)

    out = pl.pallas_call(
        cnn_mlp_kernel,
        out_shape=jax.ShapeDtypeStruct((B, OUT_DIM), jnp.float32),
        grid_spec=pltpu.PrefetchScalarGridSpec(
            num_scalar_prefetch=0,
            grid=(NPAIR,),
            in_specs=[
                const((LB, KP)),                                      # x im2col slab
                const((KP, H1)),                                      # w1 (flattened)
                const((1, H1)),                                       # b1
                pl.BlockSpec((1, 2 * H1, H2), lambda p: (p, 0, 0)),   # w2 pair (streamed)
                const((1, H2)),                                       # b2
                const((H2, MLP_HID)),                                 # w3
                const((1, MLP_HID)),                                  # b3
                const((1, MLP_HID)),                                  # w4^T
                const((1, OUT_DIM)),                                  # b4
            ],
            out_specs=pl.BlockSpec((B, OUT_DIM), lambda p: (0, 0)),
            scratch_shapes=[
                pltpu.VMEM((PAD1_ROWS, H1), jnp.bfloat16),            # padded hidden (bf16)
                pltpu.VMEM((LB, H2), jnp.float32),                    # conv2 f32 accumulator
            ],
        ),
        compiler_params=pltpu.CompilerParams(
            dimension_semantics=("arbitrary",),       # reduction axis (accumulator)
            vmem_limit_bytes=32 * 1024 * 1024,        # safe budget on v5e/v6e/v7x
        ),
    )(x_slab, w1_flat, b1, w2_pairs, b2, w3_bf, b3, w4_t, b4)
    return out  # CnnMlp.forward returns (x, None, None); the tensor part is `out`


def init_params(key):
    ks = jax.random.split(key, 8)
    s = 0.05
    w1 = jax.random.normal(ks[0], (KSIZE, IN_DIM, H1), jnp.float32) * s
    b1 = jax.random.normal(ks[1], (1, H1), jnp.float32) * s
    w2 = jax.random.normal(ks[2], (KSIZE, H1, H2), jnp.float32) * s
    b2 = jax.random.normal(ks[3], (1, H2), jnp.float32) * s
    w3 = jax.random.normal(ks[4], (H2, MLP_HID), jnp.float32) * s
    b3 = jax.random.normal(ks[5], (1, MLP_HID), jnp.float32) * s
    w4 = jax.random.normal(ks[6], (MLP_HID, OUT_DIM), jnp.float32) * s
    b4 = jax.random.normal(ks[7], (1, OUT_DIM), jnp.float32) * s
    return (w1, b1, w2, b2, w3, b3, w4, b4)


def reference(x_blc, params):
    """Pure-JAX reference mirroring the PyTorch forward (eval mode) at the kernel's
    mixed precision (bf16 MXU operands, f32 accumulation / VPU math)."""
    w1, b1, w2, b2, w3, b3, w4, b4 = params
    bf = jnp.bfloat16
    h = x_blc
    for (w, b) in ((w1, b1), (w2, b2)):
        h = lax.conv_general_dilated(h.astype(bf), w.astype(bf),
                                     window_strides=(1,),
                                     padding=[(PAD, PAD)],
                                     dimension_numbers=('NWC', 'WIO', 'NWC'),
                                     preferred_element_type=jnp.float32)
        h = jnp.maximum(h + b, 0.0)
    g = jnp.max(h, axis=1)                        # max readout over residues
    m1 = jnp.maximum(jnp.dot(g.astype(bf), w3.astype(bf),
                             preferred_element_type=jnp.float32) + b3, 0.0)
    return jnp.dot(m1, w4, preferred_element_type=jnp.float32) + b4


if __name__ == "__main__":
    key = jax.random.PRNGKey(0)
    kx, kp = jax.random.split(key)
    x = jax.random.normal(kx, (B, L, IN_DIM), jnp.float32)
    params = init_params(kp)

    out = jax.block_until_ready(cnn_mlp_forward(x, params))
    ref = reference(x, params)

    assert out.shape == (B, OUT_DIM), out.shape
    if not jnp.allclose(out, ref, rtol=1e-2, atol=1e-2):
        raise AssertionError(
            f"kernel/reference mismatch, max abs err = {jnp.max(jnp.abs(out - ref))}")
    print("KERNEL_OK")
</pallas_src>

<mosaic_0001>
module attributes {stable_mosaic.version = 11 : i64} {
  func.func @cnn_mlp_kernel(%arg0: i32, %arg1: memref<128x128xbf16, #tpu.memory_space<vmem>>, %arg2: memref<128x128xbf16, #tpu.memory_space<vmem>>, %arg3: memref<1x128xf32, #tpu.memory_space<vmem>>, %arg4: memref<1x256x128xbf16, #tpu.memory_space<vmem>>, %arg5: memref<1x128xf32, #tpu.memory_space<vmem>>, %arg6: memref<128x128xbf16, #tpu.memory_space<vmem>>, %arg7: memref<1x128xf32, #tpu.memory_space<vmem>>, %arg8: memref<1x128xf32, #tpu.memory_space<vmem>>, %arg9: memref<1x1xf32, #tpu.memory_space<vmem>>, %arg10: memref<8x1xf32, #tpu.memory_space<vmem>>, %arg11: memref<168x128xbf16, #tpu.memory_space<vmem>>, %arg12: memref<128x128xf32, #tpu.memory_space<vmem>>) attributes {dimension_semantics = [#tpu.dimension_semantics<arbitrary>], iteration_bounds = array<i64: 3>, scalar_prefetch = 0 : i64, scratch_operands = 2 : i64, tpu.core_type = #tpu.core_type<tc>, window_params = [{pipeline_mode = #tpu.pipeline_mode<synchronous>, transform_indices = @transform_0, window_bounds = array<i64: 128, 128>}, {pipeline_mode = #tpu.pipeline_mode<synchronous>, transform_indices = @transform_1, window_bounds = array<i64: 128, 128>}, {pipeline_mode = #tpu.pipeline_mode<synchronous>, transform_indices = @transform_2, window_bounds = array<i64: 1, 128>}, {transform_indices = @transform_3, window_bounds = array<i64: 1, 256, 128>}, {pipeline_mode = #tpu.pipeline_mode<synchronous>, transform_indices = @transform_4, window_bounds = array<i64: 1, 128>}, {pipeline_mode = #tpu.pipeline_mode<synchronous>, transform_indices = @transform_5, window_bounds = array<i64: 128, 128>}, {pipeline_mode = #tpu.pipeline_mode<synchronous>, transform_indices = @transform_6, window_bounds = array<i64: 1, 128>}, {pipeline_mode = #tpu.pipeline_mode<synchronous>, transform_indices = @transform_7, window_bounds = array<i64: 1, 128>}, {pipeline_mode = #tpu.pipeline_mode<synchronous>, transform_indices = @transform_8, window_bounds = array<i64: 1, 1>}, {pipeline_mode = #tpu.pipeline_mode<synchronous>, transform_indices = @transform_9, window_bounds = array<i64: 8, 1>}]} {
    %c0_i32 = arith.constant 0 : i32
    %0 = arith.cmpi eq, %arg0, %c0_i32 : i32
    %1 = arith.extui %0 : i1 to i32
    %c0_i32_0 = arith.constant 0 : i32
    %2 = arith.cmpi ne, %1, %c0_i32_0 : i32
    scf.if %2 {
      %c0_13 = arith.constant 0 : index
      %c0_14 = arith.constant 0 : index
      %24 = vector.load %arg1[%c0_13, %c0_14] : memref<128x128xbf16, #tpu.memory_space<vmem>>, vector<128x128xbf16>
      %c0_15 = arith.constant 0 : index
      %c0_16 = arith.constant 0 : index
      %25 = vector.load %arg2[%c0_15, %c0_16] : memref<128x128xbf16, #tpu.memory_space<vmem>>, vector<128x128xbf16>
      %cst_17 = arith.constant dense<0.000000e+00> : vector<128x128xf32>
      %26 = tpu.matmul %24, %25, %cst_17 {dimension_numbers = #tpu.dot_dimension_numbers<[1], [0], [0], [1], [0, 0, 1, 1], [], []>} : vector<128x128xbf16>, vector<128x128xbf16>, vector<128x128xf32> -> vector<128x128xf32>
      %c0_18 = arith.constant 0 : index
      %c0_19 = arith.constant 0 : index
      %27 = vector.load %arg3[%c0_18, %c0_19] : memref<1x128xf32, #tpu.memory_space<vmem>>, vector<1x128xf32>
      %28 = vector.broadcast %27 : vector<1x128xf32> to vector<128x128xf32>
      %29 = arith.addf %26, %28 : vector<128x128xf32>
      %cst_20 = arith.constant 0.000000e+00 : f32
      %30 = vector.broadcast %cst_20 : f32 to vector<128x128xf32>
      %31 = arith.maximumf %29, %30 : vector<128x128xf32>
      %cst_21 = arith.constant 0.000000e+00 : bf16
      %32 = vector.broadcast %cst_21 : bf16 to vector<16x128xbf16>
      %c0_22 = arith.constant 0 : index
      %c0_23 = arith.constant 0 : index
      %33 = vector.load %arg11[%c0_22, %c0_23] : memref<168x128xbf16, #tpu.memory_space<vmem>>, vector<16x128xbf16>
      tpu.vector_store %arg11[%c0_22, %c0_23], %32 {strides = array<i32>} : memref<168x128xbf16, #tpu.memory_space<vmem>>, vector<16x128xbf16>,
      %34 = arith.truncf %31 : vector<128x128xf32> to vector<128x128xbf16>
      %c16 = arith.constant 16 : index
      %c0_24 = arith.constant 0 : index
      %35 = vector.load %arg11[%c16, %c0_24] : memref<168x128xbf16, #tpu.memory_space<vmem>>, vector<128x128xbf16>
      tpu.vector_store %arg11[%c16, %c0_24], %34 {strides = array<i32>} : memref<168x128xbf16, #tpu.memory_space<vmem>>, vector<128x128xbf16>,
      %cst_25 = arith.constant 0.000000e+00 : bf16
      %36 = vector.broadcast %cst_25 : bf16 to vector<24x128xbf16>
      %c144 = arith.constant 144 : index
      %c0_26 = arith.constant 0 : index
      %37 = vector.load %arg11[%c144, %c0_26] : memref<168x128xbf16, #tpu.memory_space<vmem>>, vector<24x128xbf16>
      tpu.vector_store %arg11[%c144, %c0_26], %36 {strides = array<i32>} : memref<168x128xbf16, #tpu.memory_space<vmem>>, vector<24x128xbf16>,
      %c0_27 = arith.constant 0 : index
      %c0_28 = arith.constant 0 : index
      %38 = vector.load %arg5[%c0_27, %c0_28] : memref<1x128xf32, #tpu.memory_space<vmem>>, vector<1x128xf32>
      %39 = vector.shape_cast %38 : vector<1x128xf32> to vector<1x128xf32>
      %40 = vector.broadcast %39 : vector<1x128xf32> to vector<128x128xf32>
      %c0_29 = arith.constant 0 : index
      %c0_30 = arith.constant 0 : index
      %41 = vector.load %arg12[%c0_29, %c0_30] : memref<128x128xf32, #tpu.memory_space<vmem>>, vector<128x128xf32>
      tpu.vector_store %arg12[%c0_29, %c0_30], %40 {strides = array<i32>} : memref<128x128xf32, #tpu.memory_space<vmem>>, vector<128x128xf32>,
    } else {
    }
    %c2_i32 = arith.constant 2 : i32
    %3 = arith.muli %c2_i32, %arg0 : i32
    %c8_i32 = arith.constant 8 : i32
    %4 = arith.muli %3, %c8_i32 : i32
    %5 = tpu.assume_multiple %4, 16 : i32
    %c2_i32_1 = arith.constant 2 : i32
    %6 = arith.muli %c2_i32_1, %arg0 : i32
    %c1_i32 = arith.constant 1 : i32
    %7 = arith.addi %6, %c1_i32 : i32
    %c8_i32_2 = arith.constant 8 : i32
    %8 = arith.muli %7, %c8_i32_2 : i32
    %9 = tpu.assume_multiple %8, 8 : i32
    %10 = arith.index_cast %5 : i32 to index
    %c0 = arith.constant 0 : index
    %11 = vector.load %arg11[%10, %c0] : memref<168x128xbf16, #tpu.memory_space<vmem>>, vector<128x128xbf16>
    %12 = arith.index_cast %9 : i32 to index
    %c0_3 = arith.constant 0 : index
    %13 = vector.load %arg11[%12, %c0_3] : memref<168x128xbf16, #tpu.memory_space<vmem>>, vector<128x128xbf16>
    %14 = tpu.concatenate %11, %13 in 1 : vector<128x128xbf16>, vector<128x128xbf16> -> vector<128x256xbf16>
    %c0_4 = arith.constant 0 : index
    %c0_5 = arith.constant 0 : index
    %15 = vector.load %arg12[%c0_4, %c0_5] : memref<128x128xf32, #tpu.memory_space<vmem>>, vector<128x128xf32>
    %c0_6 = arith.constant 0 : index
    %c0_7 = arith.constant 0 : index
    %c0_8 = arith.constant 0 : index
    %16 = vector.load %arg4[%c0_6, %c0_7, %c0_8] : memref<1x256x128xbf16, #tpu.memory_space<vmem>>, vector<1x256x128xbf16>
    %17 = vector.shape_cast %16 : vector<1x256x128xbf16> to vector<256x128xbf16>
    %cst = arith.constant dense<0.000000e+00> : vector<128x128xf32>
    %18 = tpu.matmul %14, %17, %cst {dimension_numbers = #tpu.dot_dimension_numbers<[1], [0], [0], [1], [0, 0, 1, 1], [], []>} : vector<128x256xbf16>, vector<256x128xbf16>, vector<128x128xf32> -> vector<128x128xf32>
    %19 = arith.addf %15, %18 : vector<128x128xf32>
    %c0_9 = arith.constant 0 : index
    %c0_10 = arith.constant 0 : index
    %20 = vector.load %arg12[%c0_9, %c0_10] : memref<128x128xf32, #tpu.memory_space<vmem>>, vector<128x128xf32>
    tpu.vector_store %arg12[%c0_9, %c0_10], %19 {strides = array<i32>} : memref<128x128xf32, #tpu.memory_space<vmem>>, vector<128x128xf32>,
    %c2_i32_11 = arith.constant 2 : i32
    %21 = arith.cmpi eq, %arg0, %c2_i32_11 : i32
    %22 = arith.extui %21 : i1 to i32
    %c0_i32_12 = arith.constant 0 : i32
    %23 = arith.cmpi ne, %22, %c0_i32_12 : i32
    scf.if %23 {
      %c0_13 = arith.constant 0 : index
      %c0_14 = arith.constant 0 : index
      %24 = vector.load %arg12[%c0_13, %c0_14] : memref<128x128xf32, #tpu.memory_space<vmem>>, vector<128x128xf32>
      %25 = vector.extract_strided_slice %24 {offsets = [0, 0], sizes = [64, 128], strides = [1, 1]} : vector<128x128xf32> to vector<64x128xf32>
      %26 = vector.extract_strided_slice %24 {offsets = [64, 0], sizes = [64, 128], strides = [1, 1]} : vector<128x128xf32> to vector<64x128xf32>
      %27 = arith.maximumf %25, %26 : vector<64x128xf32>
      %28 = vector.extract_strided_slice %27 {offsets = [0, 0], sizes = [32, 128], strides = [1, 1]} : vector<64x128xf32> to vector<32x128xf32>
      %29 = vector.extract_strided_slice %27 {offsets = [32, 0], sizes = [32, 128], strides = [1, 1]} : vector<64x128xf32> to vector<32x128xf32>
      %30 = arith.maximumf %28, %29 : vector<32x128xf32>
      %31 = vector.extract_strided_slice %30 {offsets = [0, 0], sizes = [16, 128], strides = [1, 1]} : vector<32x128xf32> to vector<16x128xf32>
      %32 = vector.extract_strided_slice %30 {offsets = [16, 0], sizes = [16, 128], strides = [1, 1]} : vector<32x128xf32> to vector<16x128xf32>
      %33 = arith.maximumf %31, %32 : vector<16x128xf32>
      %34 = vector.extract_strided_slice %33 {offsets = [0, 0], sizes = [8, 128], strides = [1, 1]} : vector<16x128xf32> to vector<8x128xf32>
      %35 = vector.extract_strided_slice %33 {offsets = [8, 0], sizes = [8, 128], strides = [1, 1]} : vector<16x128xf32> to vector<8x128xf32>
      %36 = arith.maximumf %34, %35 : vector<8x128xf32>
      %cst_15 = arith.constant 0.000000e+00 : f32
      %37 = vector.broadcast %cst_15 : f32 to vector<8x128xf32>
      %38 = arith.maximumf %36, %37 : vector<8x128xf32>
      %39 = arith.truncf %38 : vector<8x128xf32> to vector<8x128xbf16>
      %c0_16 = arith.constant 0 : index
      %c0_17 = arith.constant 0 : index
      %40 = vector.load %arg6[%c0_16, %c0_17] : memref<128x128xbf16, #tpu.memory_space<vmem>>, vector<128x128xbf16>
      %cst_18 = arith.constant dense<0.000000e+00> : vector<8x128xf32>
      %41 = tpu.matmul %39, %40, %cst_18 {dimension_numbers = #tpu.dot_dimension_numbers<[1], [0], [0], [1], [0, 0, 1, 1], [], []>} : vector<8x128xbf16>, vector<128x128xbf16>, vector<8x128xf32> -> vector<8x128xf32>
      %c0_19 = arith.constant 0 : index
      %c0_20 = arith.constant 0 : index
      %42 = vector.load %arg7[%c0_19, %c0_20] : memref<1x128xf32, #tpu.memory_space<vmem>>, vector<1x128xf32>
      %43 = vector.broadcast %42 : vector<1x128xf32> to vector<8x128xf32>
      %44 = arith.addf %41, %43 : vector<8x128xf32>
      %cst_21 = arith.constant 0.000000e+00 : f32
      %45 = vector.broadcast %cst_21 : f32 to vector<8x128xf32>
      %46 = arith.maximumf %44, %45 : vector<8x128xf32>
      %c0_22 = arith.constant 0 : index
      %c0_23 = arith.constant 0 : index
      %47 = vector.load %arg8[%c0_22, %c0_23] : memref<1x128xf32, #tpu.memory_space<vmem>>, vector<1x128xf32>
      %48 = vector.broadcast %47 : vector<1x128xf32> to vector<8x128xf32>
      %49 = arith.mulf %46, %48 : vector<8x128xf32>
      %cst_24 = arith.constant dense<0.000000e+00> : vector<8xf32>
      %50 = vector.multi_reduction <add>, %49, %cst_24 [1] : vector<8x128xf32> to vector<8xf32>
      %51 = vector.shape_cast %50 : vector<8xf32> to vector<8x1xf32>
      %c0_25 = arith.constant 0 : index
      %c0_26 = arith.constant 0 : index
      %52 = vector.load %arg9[%c0_25, %c0_26] : memref<1x1xf32, #tpu.memory_space<vmem>>, vector<1x1xf32>
      %53 = vector.broadcast %52 : vector<1x1xf32> to vector<8x1xf32>
      %54 = arith.addf %51, %53 : vector<8x1xf32>
      %c0_27 = arith.constant 0 : index
      %c0_28 = arith.constant 0 : index
      %55 = vector.load %arg10[%c0_27, %c0_28] : memref<8x1xf32, #tpu.memory_space<vmem>>, vector<8x1xf32>
      tpu.vector_store %arg10[%c0_27, %c0_28], %54 {strides = array<i32>} : memref<8x1xf32, #tpu.memory_space<vmem>>, vector<8x1xf32>,
    } else {
    }
    return
  }
  func.func @transform_0(%arg0: i32) -> (i32, i32) {
    %c0_i32 = arith.constant 0 : i32
    %c0_i32_0 = arith.constant 0 : i32
    %c0_i32_1 = arith.constant 0 : i32
    return %c0_i32, %c0_i32_0 : i32, i32
  }
  func.func @transform_1(%arg0: i32) -> (i32, i32) {
    %c0_i32 = arith.constant 0 : i32
    %c0_i32_0 = arith.constant 0 : i32
    %c0_i32_1 = arith.constant 0 : i32
    return %c0_i32, %c0_i32_0 : i32, i32
  }
  func.func @transform_2(%arg0: i32) -> (i32, i32) {
    %c0_i32 = arith.constant 0 : i32
    %c0_i32_0 = arith.constant 0 : i32
    %c0_i32_1 = arith.constant 0 : i32
    return %c0_i32, %c0_i32_0 : i32, i32
  }
  func.func @transform_3(%arg0: i32) -> (i32, i32, i32) {
    %c0_i32 = arith.constant 0 : i32
    %c0_i32_0 = arith.constant 0 : i32
    %c0_i32_1 = arith.constant 0 : i32
    return %arg0, %c0_i32, %c0_i32_0 : i32, i32, i32
  }
  func.func @transform_4(%arg0: i32) -> (i32, i32) {
    %c0_i32 = arith.constant 0 : i32
    %c0_i32_0 = arith.constant 0 : i32
    %c0_i32_1 = arith.constant 0 : i32
    return %c0_i32, %c0_i32_0 : i32, i32
  }
  func.func @transform_5(%arg0: i32) -> (i32, i32) {
    %c0_i32 = arith.constant 0 : i32
    %c0_i32_0 = arith.constant 0 : i32
    %c0_i32_1 = arith.constant 0 : i32
    return %c0_i32, %c0_i32_0 : i32, i32
  }
  func.func @transform_6(%arg0: i32) -> (i32, i32) {
    %c0_i32 = arith.constant 0 : i32
    %c0_i32_0 = arith.constant 0 : i32
    %c0_i32_1 = arith.constant 0 : i32
    return %c0_i32, %c0_i32_0 : i32, i32
  }
  func.func @transform_7(%arg0: i32) -> (i32, i32) {
    %c0_i32 = arith.constant 0 : i32
    %c0_i32_0 = arith.constant 0 : i32
    %c0_i32_1 = arith.constant 0 : i32
    return %c0_i32, %c0_i32_0 : i32, i32
  }
  func.func @transform_8(%arg0: i32) -> (i32, i32) {
    %c0_i32 = arith.constant 0 : i32
    %c0_i32_0 = arith.constant 0 : i32
    %c0_i32_1 = arith.constant 0 : i32
    return %c0_i32, %c0_i32_0 : i32, i32
  }
  func.func @transform_9(%arg0: i32) -> (i32, i32) {
    %c0_i32 = arith.constant 0 : i32
    %c0_i32_0 = arith.constant 0 : i32
    %c0_i32_1 = arith.constant 0 : i32
    return %c0_i32, %c0_i32_0 : i32, i32
  }
}

</mosaic_0001>

<llo_original>
// kernel: tpu_custom_call.1
$region0: #{tpu_custom_call.1}
  #allocation0 [shape = 'u32[]', space=smem, size = 0x4, offset = 0x4, fixed_abs, tag = 'smem constant byte address 0x4 - core index']
  #allocation1 [shape = 'u32[144,128]{1,0:T(1,128)}', space=vmem, size = 0x12000, scoped, tag = 'internal scratch']
  #allocation2 [shape = 'bf16[168,128]{1,0:T(8,128)(2,1)}', space=vmem, size = 0xa800, scoped, tag = 'scratch operand']
  #allocation3 [shape = 'f32[128,128]{1,0:T(8,128)}', space=vmem, size = 0x10000, scoped, tag = 'scratch operand']
  #allocation4 [shape = 'f32[1,1]{1,0:T(1,128)S(1)}', space=vmem, size = 0x200, scoped, tag = 'scoped memory for tpu_custom_call.1']
  %s0 = inlined_call_operand.hbm [shape: bf16[128,128], index: 0, kind: input, shape index: {}]
  %s1 = inlined_call_operand.hbm [shape: bf16[128,128], index: 1, kind: input, shape index: {}]
  %s2 = inlined_call_operand.vmem [shape: f32[1,128], index: 2, kind: input, shape index: {}]
  %s3 = inlined_call_operand.hbm [shape: bf16[3,256,128], index: 3, kind: input, shape index: {}]
  %s4 = inlined_call_operand.vmem [shape: f32[1,128], index: 4, kind: input, shape index: {}]
  %s5 = inlined_call_operand.hbm [shape: bf16[128,128], index: 5, kind: input, shape index: {}]
  %s6 = inlined_call_operand.vmem [shape: f32[1,128], index: 6, kind: input, shape index: {}]
  %s7 = inlined_call_operand.vmem [shape: f32[1,128], index: 7, kind: input, shape index: {}]
  %s8 = inlined_call_operand.<no memory space> [shape: f32[1,1], index: 8, kind: input, shape index: {}]
  %s9 = inlined_call_operand.vmem [shape: f32[8,1], index: 9, kind: output, shape index: {}]
  %s10 = sld [smem:[#allocation0]]
  $region93: #{tpu_custom_call.1} parent=0
    _
  %s12 = ssub.s32 1, %s10
  %s13 = scalar_select 0, %s12, %s10
  %v14 = vstv %s8
  %15 = vst [vmem:[#allocation4] sm:$0x1] %v14
  $region1: #{tpu_custom_call.1} parent=0
    #allocation5 [shape = 'u8[32768]{0}', space=vmem, size = 0x8000, scoped, tag = 'input window, operand 0, single buffered']
    #allocation6 [shape = 's32[2]{0}', space=sflag, size = 0x8, scoped, tag = 'scoped memory for tpu_custom_call.1']
    #allocation7 [shape = 'u8[32768]{0}', space=vmem, size = 0x8000, scoped, tag = 'input window, operand 1, single buffered']
    #allocation8 [shape = 's32[1]{0}', space=sflag, size = 0x4, scoped, tag = 'scoped memory for tpu_custom_call.1']
    #allocation9 [shape = 'u8[131072]{0}', space=vmem, size = 0x20000, scoped, tag = 'input window, operand 3']
    #allocation10 [shape = 'u8[32768]{0}', space=vmem, size = 0x8000, scoped, tag = 'input window, operand 5, single buffered']
    %16 = vsyncpa [#allocation6], 0
    %17 = vsyncpa [#allocation8], 0
    loop: start=0, step=1, limit=5
    $region2: #{tpu_custom_call.1} parent=1 // loop_pre_header
      _
    $region3: #{tpu_custom_call.1} parent=1 // loop_header
      %s19 = sphi 0, %s23
      %p20 = scmp.ge.s32.totalorder %s19, 5
      %s27 = sphi 0, %s27
      %s29 = sphi 0, %s27
      %s30 = sphi 0, %s29
      %s44 = sphi 0, %s30
      %s48 = sphi 0, %s48
      %s50 = sphi 0, %s48
      %s51 = sphi 0, %s50
      %s65 = sphi 0, %s51
      %s69 = sphi 0, %s69
      %s71 = sphi 0, %s69
      %s72 = sphi 0, %s71
      %s86 = sphi 0, %s72
      %s92 = sphi 0, %s94
      %s95 = sphi 0, %s92
      %s96 = sphi 0, %s95
      %s112 = sphi 0, %s96
      %s116 = sphi 0, %s116
      %s118 = sphi 0, %s116
      %s119 = sphi 0, %s118
      %s133 = sphi 0, %s119
      %s137 = sphi 0, %s137
      %s139 = sphi 0, %s137
      %s140 = sphi 0, %s139
      %s154 = sphi 0, %s140
      %s158 = sphi 0, %s158
      %s160 = sphi 0, %s158
      %s161 = sphi 0, %s160
      %s175 = sphi 0, %s161
      %s179 = sphi 0, %s179
      %s181 = sphi 0, %s179
      %s182 = sphi 0, %s181
      %s196 = sphi 0, %s182
      %s200 = sphi 0, %s200
      %s202 = sphi 0, %s200
      %s203 = sphi 0, %s202
      %s217 = sphi 0, %s203
      %s221 = sphi 0, %s221
      %s223 = sphi 0, %s221
      %s224 = sphi 0, %s223
      %s238 = sphi 0, %s224
    $region4: #{tpu_custom_call.1} parent=1 // loop_header_branch
      %22 = sbr.rel (%p20) target = $region8
    $region5: #{tpu_custom_call.1} parent=1 // loop_body
      %s24 = ssub.s32 %s19, 1
      %s25 = ssub.s32 %s19, 2
      %s26 = sadd.s32 %s19, 1
      %s28 = sadd.s32 %s27, 1
      %p31 = scmp.eq.s32.totalorder %s19, 2
      %p32 = scmp.ne.s32.totalorder %s27, %s29
      %p33 = scmp.eq.s32.totalorder %s19, 0
      %p34 = por %p32, %p33
      %p35 = scmp.ne.s32.totalorder %s27, %s29
      %p36 = scmp.eq.s32.totalorder %s24, 2
      %p37 = por %p35, %p36
      %p38 = scmp.ne.s32.totalorder %s29, %s30
      %p39 = scmp.eq.s32.totalorder %s24, 0
      %p40 = por %p38, %p39
      %p41 = scmp.ne.s32.totalorder %s29, %s30
      %p42 = scmp.eq.s32.totalorder %s25, 2
      %p43 = por %p41, %p42
      %p45 = scmp.ne.s32.totalorder %s30, %s44
      %p46 = scmp.eq.s32.totalorder %s25, 0
      %p47 = por %p45, %p46
      %s49 = sadd.s32 %s48, 1
      %p52 = scmp.eq.s32.totalorder %s19, 2
      %p53 = scmp.ne.s32.totalorder %s48, %s50
      %p54 = scmp.eq.s32.totalorder %s19, 0
      %p55 = por %p53, %p54
      %p56 = scmp.ne.s32.totalorder %s48, %s50
      %p57 = scmp.eq.s32.totalorder %s24, 2
      %p58 = por %p56, %p57
      %p59 = scmp.ne.s32.totalorder %s50, %s51
      %p60 = scmp.eq.s32.totalorder %s24, 0
      %p61 = por %p59, %p60
      %p62 = scmp.ne.s32.totalorder %s50, %s51
      %p63 = scmp.eq.s32.totalorder %s25, 2
      %p64 = por %p62, %p63
      %p66 = scmp.ne.s32.totalorder %s51, %s65
      %p67 = scmp.eq.s32.totalorder %s25, 0
      %p68 = por %p66, %p67
      %s70 = sadd.s32 %s69, 1
      %p73 = scmp.eq.s32.totalorder %s19, 2
      %p74 = scmp.ne.s32.totalorder %s69, %s71
      %p75 = scmp.eq.s32.totalorder %s19, 0
      %p76 = por %p74, %p75
      %p77 = scmp.ne.s32.totalorder %s69, %s71
      %p78 = scmp.eq.s32.totalorder %s24, 2
      %p79 = por %p77, %p78
      %p80 = scmp.ne.s32.totalorder %s71, %s72
      %p81 = scmp.eq.s32.totalorder %s24, 0
      %p82 = por %p80, %p81
      %p83 = scmp.ne.s32.totalorder %s71, %s72
      %p84 = scmp.eq.s32.totalorder %s25, 2
      %p85 = por %p83, %p84
      %p87 = scmp.ne.s32.totalorder %s72, %s86
      %p88 = scmp.eq.s32.totalorder %s25, 0
      %p89 = por %p87, %p88
      %s90 = ssub.s32 %s19, %s26
      %p91 = scmp.eq.s32.totalorder %s90, 0
      %s93 = sadd.s32 %s92, 1
      %s94 = scalar_select %p91, %s92, %s93
      %p97 = pneg %p91
      %p98 = scmp.eq.s32.totalorder %s19, 2
      %p99 = por %p97, %p98
      %p100 = scmp.ne.s32.totalorder %s92, %s95
      %p101 = scmp.eq.s32.totalorder %s19, 0
      %p102 = por %p100, %p101
      %p103 = scmp.ne.s32.totalorder %s92, %s95
      %p104 = scmp.eq.s32.totalorder %s24, 2
      %p105 = por %p103, %p104
      %p106 = scmp.ne.s32.totalorder %s95, %s96
      %p107 = scmp.eq.s32.totalorder %s24, 0
      %p108 = por %p106, %p107
      %p109 = scmp.ne.s32.totalorder %s95, %s96
      %p110 = scmp.eq.s32.totalorder %s25, 2
      %p111 = por %p109, %p110
      %p113 = scmp.ne.s32.totalorder %s96, %s112
      %p114 = scmp.eq.s32.totalorder %s25, 0
      %p115 = por %p113, %p114
      %s117 = sadd.s32 %s116, 1
      %p120 = scmp.eq.s32.totalorder %s19, 2
      %p121 = scmp.ne.s32.totalorder %s116, %s118
      %p122 = scmp.eq.s32.totalorder %s19, 0
      %p123 = por %p121, %p122
      %p124 = scmp.ne.s32.totalorder %s116, %s118
      %p125 = scmp.eq.s32.totalorder %s24, 2
      %p126 = por %p124, %p125
      %p127 = scmp.ne.s32.totalorder %s118, %s119
      %p128 = scmp.eq.s32.totalorder %s24, 0
      %p129 = por %p127, %p128
      %p130 = scmp.ne.s32.totalorder %s118, %s119
      %p131 = scmp.eq.s32.totalorder %s25, 2
      %p132 = por %p130, %p131
      %p134 = scmp.ne.s32.totalorder %s119, %s133
      %p135 = scmp.eq.s32.totalorder %s25, 0
      %p136 = por %p134, %p135
      %s138 = sadd.s32 %s137, 1
      %p141 = scmp.eq.s32.totalorder %s19, 2
      %p142 = scmp.ne.s32.totalorder %s137, %s139
      %p143 = scmp.eq.s32.totalorder %s19, 0
      %p144 = por %p142, %p143
      %p145 = scmp.ne.s32.totalorder %s137, %s139
      %p146 = scmp.eq.s32.totalorder %s24, 2
      %p147 = por %p145, %p146
      %p148 = scmp.ne.s32.totalorder %s139, %s140
      %p149 = scmp.eq.s32.totalorder %s24, 0
      %p150 = por %p148, %p149
      %p151 = scmp.ne.s32.totalorder %s139, %s140
      %p152 = scmp.eq.s32.totalorder %s25, 2
      %p153 = por %p151, %p152
      %p155 = scmp.ne.s32.totalorder %s140, %s154
      %p156 = scmp.eq.s32.totalorder %s25, 0
      %p157 = por %p155, %p156
      %s159 = sadd.s32 %s158, 1
      %p162 = scmp.eq.s32.totalorder %s19, 2
      %p163 = scmp.ne.s32.totalorder %s158, %s160
      %p164 = scmp.eq.s32.totalorder %s19, 0
      %p165 = por %p163, %p164
      %p166 = scmp.ne.s32.totalorder %s158, %s160
      %p167 = scmp.eq.s32.totalorder %s24, 2
      %p168 = por %p166, %p167
      %p169 = scmp.ne.s32.totalorder %s160, %s161
      %p170 = scmp.eq.s32.totalorder %s24, 0
      %p171 = por %p169, %p170
      %p172 = scmp.ne.s32.totalorder %s160, %s161
      %p173 = scmp.eq.s32.totalorder %s25, 2
      %p174 = por %p172, %p173
      %p176 = scmp.ne.s32.totalorder %s161, %s175
      %p177 = scmp.eq.s32.totalorder %s25, 0
      %p178 = por %p176, %p177
      %s180 = sadd.s32 %s179, 1
      %p183 = scmp.eq.s32.totalorder %s19, 2
      %p184 = scmp.ne.s32.totalorder %s179, %s181
      %p185 = scmp.eq.s32.totalorder %s19, 0
      %p186 = por %p184, %p185
      %p187 = scmp.ne.s32.totalorder %s179, %s181
      %p188 = scmp.eq.s32.totalorder %s24, 2
      %p189 = por %p187, %p188
      %p190 = scmp.ne.s32.totalorder %s181, %s182
      %p191 = scmp.eq.s32.totalorder %s24, 0
      %p192 = por %p190, %p191
      %p193 = scmp.ne.s32.totalorder %s181, %s182
      %p194 = scmp.eq.s32.totalorder %s25, 2
      %p195 = por %p193, %p194
      %p197 = scmp.ne.s32.totalorder %s182, %s196
      %p198 = scmp.eq.s32.totalorder %s25, 0
      %p199 = por %p197, %p198
      %s201 = sadd.s32 %s200, 1
      %p204 = scmp.eq.s32.totalorder %s19, 2
      %p205 = scmp.ne.s32.totalorder %s200, %s202
      %p206 = scmp.eq.s32.totalorder %s19, 0
      %p207 = por %p205, %p206
      %p208 = scmp.ne.s32.totalorder %s200, %s202
      %p209 = scmp.eq.s32.totalorder %s24, 2
      %p210 = por %p208, %p209
      %p211 = scmp.ne.s32.totalorder %s202, %s203
      %p212 = scmp.eq.s32.totalorder %s24, 0
      %p213 = por %p211, %p212
      %p214 = scmp.ne.s32.totalorder %s202, %s203
      %p215 = scmp.eq.s32.totalorder %s25, 2
      %p216 = por %p214, %p215
      %p218 = scmp.ne.s32.totalorder %s203, %s217
      %p219 = scmp.eq.s32.totalorder %s25, 0
      %p220 = por %p218, %p219
      %s222 = sadd.s32 %s221, 1
      %p225 = scmp.eq.s32.totalorder %s19, 2
      %p226 = scmp.ne.s32.totalorder %s221, %s223
      %p227 = scmp.eq.s32.totalorder %s19, 0
      %p228 = por %p226, %p227
      %p229 = scmp.ne.s32.totalorder %s221, %s223
      %p230 = scmp.eq.s32.totalorder %s24, 2
      %p231 = por %p229, %p230
      %p232 = scmp.ne.s32.totalorder %s223, %s224
      %p233 = scmp.eq.s32.totalorder %s24, 0
      %p234 = por %p232, %p233
      %p235 = scmp.ne.s32.totalorder %s223, %s224
      %p236 = scmp.eq.s32.totalorder %s25, 2
      %p237 = por %p235, %p236
      %p239 = scmp.ne.s32.totalorder %s224, %s238
      %p240 = scmp.eq.s32.totalorder %s25, 0
      %p241 = por %p239, %p240
      %p242 = scmp.le.s32.totalorder 1, %s19
      %p243 = scmp.lt.s32.totalorder %s19, 4
      %p244 = pnand %p242, %p243
      %p245 = pneg %p244
      // Predicated region
      $region9: #{tpu_custom_call.1} parent=5 // pred_check
        _
      $region10: #{tpu_custom_call.1} parent=5 // pred_check_branch
        %247 = sbr.rel (%p244) target = $region12
      $region11: #{tpu_custom_call.1} parent=5 // pred_region
        %s248 = ssub.s32 %s19, 1
        // Predicated region
        $region13: #{tpu_custom_call.1} parent=11 // pred_check
          %p249 = pneg %p40
        $region14: #{tpu_custom_call.1} parent=11 // pred_check_branch
          %251 = sbr.rel (%p249) target = $region16
        $region15: #{tpu_custom_call.1} parent=11 // pred_region
          %s253 = ssub.s32 1024, 1024
          %254 = vsyncadd [#allocation6], %s253
          %s255 = sshll.u32 [#allocation5], 4
          %s256 = int_to_ptr.vmem [resolvable:$true] %s255
          %261 = dma.hbm_to_vmem [thread:$0]  %s0, 1024, %s256, [#allocation6], 64, 64, 4
        $region16: #{tpu_custom_call.1} parent=11 // pred_fallthru
          _
        // Predicated region
        $region17: #{tpu_custom_call.1} parent=11 // pred_check
          %p262 = pneg %p61
        $region18: #{tpu_custom_call.1} parent=11 // pred_check_branch
          %264 = sbr.rel (%p262) target = $region20
        $region19: #{tpu_custom_call.1} parent=11 // pred_region
          %s266 = ssub.s32 1024, 1024
          %267 = vsyncadd [#allocation8], %s266
          %s268 = sshll.u32 [#allocation7], 4
          %s269 = int_to_ptr.vmem [resolvable:$true] %s268
          %274 = dma.hbm_to_vmem [thread:$0]  %s1, 1024, %s269, [#allocation8], 64, 64, 4
        $region20: #{tpu_custom_call.1} parent=11 // pred_fallthru
          _
        // Predicated region
        $region21: #{tpu_custom_call.1} parent=11 // pred_check
          %p275 = pneg %p82
        $region22: #{tpu_custom_call.1} parent=11 // pred_check_branch
          %277 = sbr.rel (%p275) target = $region24
        $region23: #{tpu_custom_call.1} parent=11 // pred_region
          _
        $region24: #{tpu_custom_call.1} parent=11 // pred_fallthru
          _
        // Predicated region
        $region25: #{tpu_custom_call.1} parent=11 // pred_check
          %p278 = pneg %p129
        $region26: #{tpu_custom_call.1} parent=11 // pred_check_branch
          %280 = sbr.rel (%p278) target = $region28
        $region27: #{tpu_custom_call.1} parent=11 // pred_region
          _
        $region28: #{tpu_custom_call.1} parent=11 // pred_fallthru
          _
        // Predicated region
        $region29: #{tpu_custom_call.1} parent=11 // pred_check
          %p281 = pneg %p150
        $region30: #{tpu_custom_call.1} parent=11 // pred_check_branch
          %283 = sbr.rel (%p281) target = $region32
        $region31: #{tpu_custom_call.1} parent=11 // pred_region
          %s285 = ssub.s32 1024, 1024
          %286 = vsyncadd [#allocation8], %s285
          %s287 = sshll.u32 [#allocation10], 4
          %s288 = int_to_ptr.vmem [resolvable:$true] %s287
          %293 = dma.hbm_to_vmem [thread:$0]  %s5, 1024, %s288, [#allocation8], 64, 64, 4
        $region32: #{tpu_custom_call.1} parent=11 // pred_fallthru
          _
        // Predicated region
        $region33: #{tpu_custom_call.1} parent=11 // pred_check
          %p294 = pneg %p171
        $region34: #{tpu_custom_call.1} parent=11 // pred_check_branch
          %296 = sbr.rel (%p294) target = $region36
        $region35: #{tpu_custom_call.1} parent=11 // pred_region
          _
        $region36: #{tpu_custom_call.1} parent=11 // pred_fallthru
          _
        // Predicated region
        $region37: #{tpu_custom_call.1} parent=11 // pred_check
          %p297 = pneg %p192
        $region38: #{tpu_custom_call.1} parent=11 // pred_check_branch
          %299 = sbr.rel (%p297) target = $region40
        $region39: #{tpu_custom_call.1} parent=11 // pred_region
          _
        $region40: #{tpu_custom_call.1} parent=11 // pred_fallthru
          _
        // Predicated region
        $region41: #{tpu_custom_call.1} parent=11 // pred_check
          %p300 = pneg %p213
        $region42: #{tpu_custom_call.1} parent=11 // pred_check_branch
          %302 = sbr.rel (%p300) target = $region44
        $region43: #{tpu_custom_call.1} parent=11 // pred_region
          _
        $region44: #{tpu_custom_call.1} parent=11 // pred_fallthru
          _
      $region12: #{tpu_custom_call.1} parent=5 // pred_fallthru
        _
      %p303 = scmp.lt.s32.totalorder %s19, 3
      // Predicated region
      $region45: #{tpu_custom_call.1} parent=5 // pred_check
        %p304 = pneg %p303
      $region46: #{tpu_custom_call.1} parent=5 // pred_check_branch
        %306 = sbr.rel (%p304) target = $region48
      $region47: #{tpu_custom_call.1} parent=5 // pred_region
        // Predicated region
        $region49: #{tpu_custom_call.1} parent=47 // pred_check
          %p307 = pneg %p102
        $region50: #{tpu_custom_call.1} parent=47 // pred_check_branch
          %309 = sbr.rel (%p307) target = $region52
        $region51: #{tpu_custom_call.1} parent=47 // pred_region
          %s310 = sand.u32 %s19, 1
          %s311 = scalar_lea.sflag [#allocation6], %s310
          %s312 = sand.u32 %s92, 1
          %s313 = smul.addr %s312, 128
          %s314 = scalar_lea.vmem [#allocation9], %s313
          %s316 = ssub.s32 2048, 2048
          %317 = vsyncadd %s311, %s316
          %s318 = smul.addr %s19, 32
          %s319 = smul.addr %s318, 64
          %s320 = scalar_lea.hbm %s3, %s319
          %s321 = sshll.u32 %s314, 4
          %s322 = int_to_ptr.vmem [resolvable:$true] %s321
          %327 = dma.hbm_to_vmem [thread:$0]  %s320, 2048, %s322, %s311, 64, 64, 4
        $region52: #{tpu_custom_call.1} parent=47 // pred_fallthru
          _
      $region48: #{tpu_custom_call.1} parent=5 // pred_fallthru
        _
      %p328 = scmp.le.s32.totalorder 1, %s19
      %p329 = scmp.lt.s32.totalorder %s19, 4
      %p330 = pnand %p328, %p329
      %p331 = pneg %p330
      // Predicated region
      $region53: #{tpu_custom_call.1} parent=5 // pred_check
        _
      $region54: #{tpu_custom_call.1} parent=5 // pred_check_branch
        %333 = sbr.rel (%p330) target = $region56
      $region55: #{tpu_custom_call.1} parent=5 // pred_region
        %s334 = ssub.s32 %s19, 1
        // Predicated region
        $region57: #{tpu_custom_call.1} parent=55 // pred_check
          %p335 = pneg %p40
        $region58: #{tpu_custom_call.1} parent=55 // pred_check_branch
          %337 = sbr.rel (%p335) target = $region60
        $region59: #{tpu_custom_call.1} parent=55 // pred_region
          %338 = dma.done [#allocation6], 1024
        $region60: #{tpu_custom_call.1} parent=55 // pred_fallthru
          _
        // Predicated region
        $region61: #{tpu_custom_call.1} parent=55 // pred_check
          %p339 = pneg %p61
        $region62: #{tpu_custom_call.1} parent=55 // pred_check_branch
          %341 = sbr.rel (%p339) target = $region64
        $region63: #{tpu_custom_call.1} parent=55 // pred_region
          %342 = dma.done [#allocation8], 1024
        $region64: #{tpu_custom_call.1} parent=55 // pred_fallthru
          _
        %s343 = sand.u32 %s24, 1
        %s344 = scalar_lea.sflag [#allocation6], %s343
        %s345 = sand.u32 %s95, 1
        %s346 = smul.addr %s345, 128
        %s347 = scalar_lea.vmem [#allocation9], %s346
        // Predicated region
        $region65: #{tpu_custom_call.1} parent=55 // pred_check
          %p348 = pneg %p108
        $region66: #{tpu_custom_call.1} parent=55 // pred_check_branch
          %350 = sbr.rel (%p348) target = $region68
        $region67: #{tpu_custom_call.1} parent=55 // pred_region
          %351 = dma.done %s344, 2048
        $region68: #{tpu_custom_call.1} parent=55 // pred_fallthru
          _
        // Predicated region
        $region69: #{tpu_custom_call.1} parent=55 // pred_check
          %p352 = pneg %p150
        $region70: #{tpu_custom_call.1} parent=55 // pred_check_branch
          %354 = sbr.rel (%p352) target = $region72
        $region71: #{tpu_custom_call.1} parent=55 // pred_region
          %355 = dma.done [#allocation8], 1024
        $region72: #{tpu_custom_call.1} parent=55 // pred_fallthru
          _
        %p356 = pneg %p40
        %p357 = pneg %p37
        %p358 = pneg %p61
        %p359 = pneg %p58
        %p360 = pneg %p82
        %p361 = pneg %p79
        %s362 = sand.u32 %s24, 1
        %s363 = scalar_lea.sflag [#allocation6], %s362
        %s364 = sand.u32 %s95, 1
        %s365 = smul.addr %s364, 128
        %s366 = scalar_lea.vmem [#allocation9], %s365
        %p367 = pneg %p108
        %p368 = pneg %p105
        %p369 = pneg %p129
        %p370 = pneg %p126
        %p371 = pneg %p150
        %p372 = pneg %p147
        %p373 = pneg %p171
        %p374 = pneg %p168
        %p375 = pneg %p192
        %p376 = pneg %p189
        %p377 = pneg %p213
        %p378 = pneg %p210
        %p379 = pneg %p234
        %p380 = pneg %p231
        %p382 = scmp.eq.s32.totalorder %s24, 0
        // Predicated region
        $region73: #{tpu_custom_call.1} parent=55 // pred_check
          %p383 = pneg %p382
        $region74: #{tpu_custom_call.1} parent=55 // pred_check_branch
          %385 = sbr.rel (%p383) target = $region76
        $region75: #{tpu_custom_call.1} parent=55 // pred_region
          %v386 = vld [vmem:[#allocation5] sm:$0xf]
          %v387 = vld [vmem:[#allocation5 + $0x4] sm:$0xf]
          %v388 = vld [vmem:[#allocation5 + $0x8] sm:$0xf]
          %v389 = vld [vmem:[#allocation5 + $0xc] sm:$0xf]
          %v390 = vld [vmem:[#allocation5 + $0x10] sm:$0xf]
          %v391 = vld [vmem:[#allocation5 + $0x14] sm:$0xf]
          %v392 = vld [vmem:[#allocation5 + $0x18] sm:$0xf]
          %v393 = vld [vmem:[#allocation5 + $0x1c] sm:$0xf]
          %v394 = vld [vmem:[#allocation5 + $0x20] sm:$0xf]
          %v395 = vld [vmem:[#allocation5 + $0x24] sm:$0xf]
          %v396 = vld [vmem:[#allocation5 + $0x28] sm:$0xf]
          %v397 = vld [vmem:[#allocation5 + $0x2c] sm:$0xf]
          %v398 = vld [vmem:[#allocation5 + $0x30] sm:$0xf]
          %v399 = vld [vmem:[#allocation5 + $0x34] sm:$0xf]
          %v400 = vld [vmem:[#allocation5 + $0x38] sm:$0xf]
          %v401 = vld [vmem:[#allocation5 + $0x3c] sm:$0xf]
          %v402 = vld [vmem:[#allocation7] sm:$0xf]
          %v403 = vld [vmem:[#allocation7 + $0x4] sm:$0xf]
          %v404 = vld [vmem:[#allocation7 + $0x8] sm:$0xf]
          %v405 = vld [vmem:[#allocation7 + $0xc] sm:$0xf]
          %v406 = vld [vmem:[#allocation7 + $0x10] sm:$0xf]
          %v407 = vld [vmem:[#allocation7 + $0x14] sm:$0xf]
          %v408 = vld [vmem:[#allocation7 + $0x18] sm:$0xf]
          %v409 = vld [vmem:[#allocation7 + $0x1c] sm:$0xf]
          %v410 = vld [vmem:[#allocation7 + $0x20] sm:$0xf]
          %v411 = vld [vmem:[#allocation7 + $0x24] sm:$0xf]
          %v412 = vld [vmem:[#allocation7 + $0x28] sm:$0xf]
          %v413 = vld [vmem:[#allocation7 + $0x2c] sm:$0xf]
          %v414 = vld [vmem:[#allocation7 + $0x30] sm:$0xf]
          %v415 = vld [vmem:[#allocation7 + $0x34] sm:$0xf]
          %v416 = vld [vmem:[#allocation7 + $0x38] sm:$0xf]
          %v417 = vld [vmem:[#allocation7 + $0x3c] sm:$0xf]
          %v418 = vld [vmem:[%s2] sm:$0x1]
          %v420 = vlaneseq
          %v421 = vshrl.u32 %v420, 7
          %v422 = vsub.s32 0, %v421
          %v423 = vrot.slane %v418, %v422
          %v441 = vunpack.c.l.b16 %v386
          %v442 = vunpack.c.l.b16 %v387
          %v443 = vunpack.c.l.b16 %v388
          %v444 = vunpack.c.l.b16 %v389
          %v445 = vunpack.c.l.b16 %v390
          %v446 = vunpack.c.l.b16 %v391
          %v447 = vunpack.c.l.b16 %v392
          %v448 = vunpack.c.l.b16 %v393
          %v449 = vunpack.c.l.b16 %v394
          %v450 = vunpack.c.l.b16 %v395
          %v451 = vunpack.c.l.b16 %v396
          %v452 = vunpack.c.l.b16 %v397
          %v453 = vunpack.c.l.b16 %v398
          %v454 = vunpack.c.l.b16 %v399
          %v455 = vunpack.c.l.b16 %v400
          %v456 = vunpack.c.l.b16 %v401
          %v457 = vpack.c.b16 %v442, %v441
          %v458 = vpack.c.b16 %v444, %v443
          %v459 = vpack.c.b16 %v446, %v445
          %v460 = vpack.c.b16 %v448, %v447
          %v461 = vpack.c.b16 %v450, %v449
          %v462 = vpack.c.b16 %v452, %v451
          %v463 = vpack.c.b16 %v454, %v453
          %v464 = vpack.c.b16 %v456, %v455
          %v489 = vunpack.c.l.b16 %v402
          %v490 = vunpack.c.l.b16 %v403
          %v491 = vunpack.c.l.b16 %v404
          %v492 = vunpack.c.l.b16 %v405
          %v493 = vunpack.c.l.b16 %v406
          %v494 = vunpack.c.l.b16 %v407
          %v495 = vunpack.c.l.b16 %v408
          %v496 = vunpack.c.l.b16 %v409
          %v497 = vunpack.c.l.b16 %v410
          %v498 = vunpack.c.l.b16 %v411
          %v499 = vunpack.c.l.b16 %v412
          %v500 = vunpack.c.l.b16 %v413
          %v501 = vunpack.c.l.b16 %v414
          %v502 = vunpack.c.l.b16 %v415
          %v503 = vunpack.c.l.b16 %v416
          %v504 = vunpack.c.l.b16 %v417
          %v505 = vpack.c.b16 %v490, %v489
          %v506 = vpack.c.b16 %v492, %v491
          %v507 = vpack.c.b16 %v494, %v493
          %v508 = vpack.c.b16 %v496, %v495
          %v509 = vpack.c.b16 %v498, %v497
          %v510 = vpack.c.b16 %v500, %v499
          %v511 = vpack.c.b16 %v502, %v501
          %v512 = vpack.c.b16 %v504, %v503
          %521 = vmatprep.subr.bf16.mxu0 0
          %522 = vmatpush1.bf16.msra.mxu0 %v505
          %523 = vmatprep.subr.bf16.mxu0 0
          %524 = vmatpush1.bf16.msra.mxu0 %v506
          %525 = vmatprep.subr.bf16.mxu0 0
          %526 = vmatpush1.bf16.msra.mxu0 %v507
          %527 = vmatprep.subr.bf16.mxu0 0
          %528 = vmatpush1.bf16.msra.mxu0 %v508
          %529 = vmatprep.subr.bf16.mxu0 0
          %530 = vmatpush1.bf16.msra.mxu0 %v509
          %531 = vmatprep.subr.bf16.mxu0 0
          %532 = vmatpush1.bf16.msra.mxu0 %v510
          %533 = vmatprep.subr.bf16.mxu0 0
          %534 = vmatpush1.bf16.msra.mxu0 %v511
          %535 = vmatprep.subr.bf16.mxu0 0
          %536 = vmatpush1.bf16.msra.mxu0 %v512
          %537 = vmatprep.subr.bf16.mxu0 0
          %538 = vmatpush1.bf16.msra.mxu0 0
          %539 = vmatprep.subr.bf16.mxu0 0
          %540 = vmatpush1.bf16.msra.mxu0 0
          %541 = vmatprep.subr.bf16.mxu0 0
          %542 = vmatpush1.bf16.msra.mxu0 0
          %543 = vmatprep.subr.bf16.mxu0 0
          %544 = vmatpush1.bf16.msra.mxu0 0
          %545 = vmatprep.subr.bf16.mxu0 0
          %546 = vmatpush1.bf16.msra.mxu0 0
          %547 = vmatprep.subr.bf16.mxu0 0
          %548 = vmatpush1.bf16.msra.mxu0 0
          %549 = vmatprep.subr.bf16.mxu0 0
          %550 = vmatpush1.bf16.msra.mxu0 0
          %551 = vmatprep.subr.bf16.mxu0 0
          %552 = vmatpush1.bf16.msra.mxu0 0
          %553 = vmatprep.mubr.bf16.mxu0 0
          %554 = vmatmul.mubr.bf16.gmra.mrb[0].mxu0 %v457
          %v555 = vpop.f32.mrb[0].mxu0
          %v556 = vadd.f32 %v423, %v555
          %v557 = vpop.f32.mrb[0].mxu0
          %v558 = vpop.f32.mrb[0].mxu0
          %v559 = vadd.f32 %v423, %v558
          %v560 = vpop.f32.mrb[0].mxu0
          %561 = vmatprep.mubr.bf16.mxu0 0
          %562 = vmatmul.mubr.bf16.gmra.mrb[0].mxu0 %v458
          %v563 = vpop.f32.mrb[0].mxu0
          %v564 = vadd.f32 %v423, %v563
          %v565 = vpop.f32.mrb[0].mxu0
          %v566 = vpop.f32.mrb[0].mxu0
          %v567 = vadd.f32 %v423, %v566
          %v568 = vpop.f32.mrb[0].mxu0
          %569 = vmatprep.mubr.bf16.mxu0 0
          %570 = vmatmul.mubr.bf16.gmra.mrb[0].mxu0 %v459
          %v571 = vpop.f32.mrb[0].mxu0
          %v572 = vadd.f32 %v423, %v571
          %v573 = vpop.f32.mrb[0].mxu0
          %v574 = vpop.f32.mrb[0].mxu0
          %v575 = vadd.f32 %v423, %v574
          %v576 = vpop.f32.mrb[0].mxu0
          %577 = vmatprep.mubr.bf16.mxu0 0
          %578 = vmatmul.mubr.bf16.gmra.mrb[0].mxu0 %v460
          %v579 = vpop.f32.mrb[0].mxu0
          %v580 = vadd.f32 %v423, %v579
          %v581 = vpop.f32.mrb[0].mxu0
          %v582 = vpop.f32.mrb[0].mxu0
          %v583 = vadd.f32 %v423, %v582
          %v584 = vpop.f32.mrb[0].mxu0
          %585 = vmatprep.mubr.bf16.mxu0 0
          %586 = vmatmul.mubr.bf16.gmra.mrb[0].mxu0 %v461
          %v587 = vpop.f32.mrb[0].mxu0
          %v588 = vadd.f32 %v423, %v587
          %v589 = vpop.f32.mrb[0].mxu0
          %v590 = vpop.f32.mrb[0].mxu0
          %v591 = vadd.f32 %v423, %v590
          %v592 = vpop.f32.mrb[0].mxu0
          %593 = vmatprep.mubr.bf16.mxu0 0
          %594 = vmatmul.mubr.bf16.gmra.mrb[0].mxu0 %v462
          %v595 = vpop.f32.mrb[0].mxu0
          %v596 = vadd.f32 %v423, %v595
          %v597 = vpop.f32.mrb[0].mxu0
          %v598 = vpop.f32.mrb[0].mxu0
          %v599 = vadd.f32 %v423, %v598
          %v600 = vpop.f32.mrb[0].mxu0
          %601 = vmatprep.mubr.bf16.mxu0 0
          %602 = vmatmul.mubr.bf16.gmra.mrb[0].mxu0 %v463
          %v603 = vpop.f32.mrb[0].mxu0
          %v604 = vadd.f32 %v423, %v603
          %v605 = vpop.f32.mrb[0].mxu0
          %v606 = vpop.f32.mrb[0].mxu0
          %v607 = vadd.f32 %v423, %v606
          %v608 = vpop.f32.mrb[0].mxu0
          %609 = vmatprep.mubr.bf16.mxu0 0
          %610 = vmatmul.mubr.bf16.gmra.mrb[0].mxu0 %v464
          %v611 = vpop.f32.mrb[0].mxu0
          %v612 = vadd.f32 %v423, %v611
          %v613 = vpop.f32.mrb[0].mxu0
          %v614 = vpop.f32.mrb[0].mxu0
          %v615 = vadd.f32 %v423, %v614
          %v616 = vpop.f32.mrb[0].mxu0
          %617 = vdwg.mxu0
          %v618 = vmax.f32 %v556, 0.0
          %v619 = vmax.f32 %v559, 0.0
          %v620 = vmax.f32 %v564, 0.0
          %v621 = vmax.f32 %v567, 0.0
          %v622 = vmax.f32 %v572, 0.0
          %v623 = vmax.f32 %v575, 0.0
          %v624 = vmax.f32 %v580, 0.0
          %v625 = vmax.f32 %v583, 0.0
          %v626 = vmax.f32 %v588, 0.0
          %v627 = vmax.f32 %v591, 0.0
          %v628 = vmax.f32 %v596, 0.0
          %v629 = vmax.f32 %v599, 0.0
          %v630 = vmax.f32 %v604, 0.0
          %v631 = vmax.f32 %v607, 0.0
          %v632 = vmax.f32 %v612, 0.0
          %v633 = vmax.f32 %v615, 0.0
          %634 = vst [vmem:[#allocation2] sm:$0xf] 0
          %635 = vst [vmem:[#allocation2 + $0x4] sm:$0xf] 0
          %v636 = vpack.c.bf16 %v619, %v618
          %v637 = vpack.c.bf16 %v621, %v620
          %v638 = vpack.c.bf16 %v623, %v622
          %v639 = vpack.c.bf16 %v625, %v624
          %v640 = vpack.c.bf16 %v627, %v626
          %v641 = vpack.c.bf16 %v629, %v628
          %v642 = vpack.c.bf16 %v631, %v630
          %v643 = vpack.c.bf16 %v633, %v632
          %v652 = vunpack.c.l.b16 %v636
          %v653 = vunpack.c.h.b16 %v636
          %v654 = vunpack.c.l.b16 %v637
          %v655 = vunpack.c.h.b16 %v637
          %v656 = vunpack.c.l.b16 %v638
          %v657 = vunpack.c.h.b16 %v638
          %v658 = vunpack.c.l.b16 %v639
          %v659 = vunpack.c.h.b16 %v639
          %v660 = vunpack.c.l.b16 %v640
          %v661 = vunpack.c.h.b16 %v640
          %v662 = vunpack.c.l.b16 %v641
          %v663 = vunpack.c.h.b16 %v641
          %v664 = vunpack.c.l.b16 %v642
          %v665 = vunpack.c.h.b16 %v642
          %v666 = vunpack.c.l.b16 %v643
          %v667 = vunpack.c.h.b16 %v643
          %v668 = vpack.c.b16 %v652, %v652
          %v669 = vpack.c.b16 %v653, %v653
          %v670 = vpack.c.b16 %v654, %v654
          %v671 = vpack.c.b16 %v655, %v655
          %v672 = vpack.c.b16 %v656, %v656
          %v673 = vpack.c.b16 %v657, %v657
          %v674 = vpack.c.b16 %v658, %v658
          %v675 = vpack.c.b16 %v659, %v659
          %v676 = vpack.c.b16 %v660, %v660
          %v677 = vpack.c.b16 %v661, %v661
          %v678 = vpack.c.b16 %v662, %v662
          %v679 = vpack.c.b16 %v663, %v663
          %v680 = vpack.c.b16 %v664, %v664
          %v681 = vpack.c.b16 %v665, %v665
          %v682 = vpack.c.b16 %v666, %v666
          %v683 = vpack.c.b16 %v667, %v667
          %700 = vst [vmem:[#allocation2 + $0x8] sm:$0xf] %v668
          %701 = vst [vmem:[#allocation2 + $0xc] sm:$0xf] %v669
          %702 = vst [vmem:[#allocation2 + $0x10] sm:$0xf] %v670
          %703 = vst [vmem:[#allocation2 + $0x14] sm:$0xf] %v671
          %704 = vst [vmem:[#allocation2 + $0x18] sm:$0xf] %v672
          %705 = vst [vmem:[#allocation2 + $0x1c] sm:$0xf] %v673
          %706 = vst [vmem:[#allocation2 + $0x20] sm:$0xf] %v674
          %707 = vst [vmem:[#allocation2 + $0x24] sm:$0xf] %v675
          %708 = vst [vmem:[#allocation2 + $0x28] sm:$0xf] %v676
          %709 = vst [vmem:[#allocation2 + $0x2c] sm:$0xf] %v677
          %710 = vst [vmem:[#allocation2 + $0x30] sm:$0xf] %v678
          %711 = vst [vmem:[#allocation2 + $0x34] sm:$0xf] %v679
          %712 = vst [vmem:[#allocation2 + $0x38] sm:$0xf] %v680
          %713 = vst [vmem:[#allocation2 + $0x3c] sm:$0xf] %v681
          %714 = vst [vmem:[#allocation2 + $0x40] sm:$0xf] %v682
          %715 = vst [vmem:[#allocation2 + $0x44] sm:$0xf] %v683
          %716 = vst [vmem:[#allocation2 + $0x48] sm:$0xf] 0
          %717 = vst [vmem:[#allocation2 + $0x4c] sm:$0xf] 0
          %718 = vst [vmem:[#allocation2 + $0x50] sm:$0xf] 0
          %v719 = vld [vmem:[%s4] sm:$0x1]
          %v721 = vlaneseq
          %v722 = vshrl.u32 %v721, 7
          %v723 = vsub.s32 0, %v722
          %v724 = vrot.slane %v719, %v723
          %726 = vst [vmem:[#allocation3] sm:$0xff] %v724
          %727 = vst [vmem:[#allocation3 + $0x8] sm:$0xff] %v724
          %728 = vst [vmem:[#allocation3 + $0x10] sm:$0xff] %v724
          %729 = vst [vmem:[#allocation3 + $0x18] sm:$0xff] %v724
          %730 = vst [vmem:[#allocation3 + $0x20] sm:$0xff] %v724
          %731 = vst [vmem:[#allocation3 + $0x28] sm:$0xff] %v724
          %732 = vst [vmem:[#allocation3 + $0x30] sm:$0xff] %v724
          %733 = vst [vmem:[#allocation3 + $0x38] sm:$0xff] %v724
          %734 = vst [vmem:[#allocation3 + $0x40] sm:$0xff] %v724
          %735 = vst [vmem:[#allocation3 + $0x48] sm:$0xff] %v724
          %736 = vst [vmem:[#allocation3 + $0x50] sm:$0xff] %v724
          %737 = vst [vmem:[#allocation3 + $0x58] sm:$0xff] %v724
          %738 = vst [vmem:[#allocation3 + $0x60] sm:$0xff] %v724
          %739 = vst [vmem:[#allocation3 + $0x68] sm:$0xff] %v724
          %740 = vst [vmem:[#allocation3 + $0x70] sm:$0xff] %v724
          %741 = vst [vmem:[#allocation3 + $0x78] sm:$0xff] %v724
        $region76: #{tpu_custom_call.1} parent=55 // pred_fallthru
          _
        %s742 = smul.u32 %s24, 16
        %s743 = smul.u32 %s24, 2
        %s744 = sadd.s32 %s743, 1
        %s745 = smul.u32 %s744, 8
        %s746 = sshra.s32 %s742, 3
        %s747 = sand.u32 %s742, 7
        %s748 = smul.addr %s746, 4
        %s749 = scalar_lea.vmem [#allocation2], %s748
        %v750 = vld [vmem:[%s749] sm:$0xf]
        %v751 = vld [vmem:[%s749 + $0x4] sm:$0xf]
        %v752 = vld [vmem:[%s749 + $0x8] sm:$0xf]
        %v753 = vld [vmem:[%s749 + $0xc] sm:$0xf]
        %v754 = vld [vmem:[%s749 + $0x10] sm:$0xf]
        %v755 = vld [vmem:[%s749 + $0x14] sm:$0xf]
        %v756 = vld [vmem:[%s749 + $0x18] sm:$0xf]
        %v757 = vld [vmem:[%s749 + $0x1c] sm:$0xf]
        %v758 = vld [vmem:[%s749 + $0x20] sm:$0xf]
        %v759 = vld [vmem:[%s749 + $0x24] sm:$0xf]
        %v760 = vld [vmem:[%s749 + $0x28] sm:$0xf]
        %v761 = vld [vmem:[%s749 + $0x2c] sm:$0xf]
        %v762 = vld [vmem:[%s749 + $0x30] sm:$0xf]
        %v763 = vld [vmem:[%s749 + $0x34] sm:$0xf]
        %v764 = vld [vmem:[%s749 + $0x38] sm:$0xf]
        %v765 = vld [vmem:[%s749 + $0x3c] sm:$0xf]
        %s766 = sshra.s32 %s745, 3
        %s767 = sand.u32 %s745, 7
        %s768 = smul.addr %s766, 4
        %s769 = scalar_lea.vmem [#allocation2], %s768
        %v770 = vld [vmem:[%s769] sm:$0xf]
        %v771 = vld [vmem:[%s769 + $0x4] sm:$0xf]
        %v772 = vld [vmem:[%s769 + $0x8] sm:$0xf]
        %v773 = vld [vmem:[%s769 + $0xc] sm:$0xf]
        %v774 = vld [vmem:[%s769 + $0x10] sm:$0xf]
        %v775 = vld [vmem:[%s769 + $0x14] sm:$0xf]
        %v776 = vld [vmem:[%s769 + $0x18] sm:$0xf]
        %v777 = vld [vmem:[%s769 + $0x1c] sm:$0xf]
        %v778 = vld [vmem:[%s769 + $0x20] sm:$0xf]
        %v779 = vld [vmem:[%s769 + $0x24] sm:$0xf]
        %v780 = vld [vmem:[%s769 + $0x28] sm:$0xf]
        %v781 = vld [vmem:[%s769 + $0x2c] sm:$0xf]
        %v782 = vld [vmem:[%s769 + $0x30] sm:$0xf]
        %v783 = vld [vmem:[%s769 + $0x34] sm:$0xf]
        %v784 = vld [vmem:[%s769 + $0x38] sm:$0xf]
        %v785 = vld [vmem:[%s769 + $0x3c] sm:$0xf]
        %v802 = vunpack.c.l.b16 %v750
        %v803 = vunpack.c.l.b16 %v751
        %v804 = vunpack.c.l.b16 %v752
        %v805 = vunpack.c.l.b16 %v753
        %v806 = vunpack.c.l.b16 %v754
        %v807 = vunpack.c.l.b16 %v755
        %v808 = vunpack.c.l.b16 %v756
        %v809 = vunpack.c.l.b16 %v757
        %v810 = vunpack.c.l.b16 %v758
        %v811 = vunpack.c.l.b16 %v759
        %v812 = vunpack.c.l.b16 %v760
        %v813 = vunpack.c.l.b16 %v761
        %v814 = vunpack.c.l.b16 %v762
        %v815 = vunpack.c.l.b16 %v763
        %v816 = vunpack.c.l.b16 %v764
        %v817 = vunpack.c.l.b16 %v765
        %v818 = vpack.c.b16 %v803, %v802
        %v819 = vpack.c.b16 %v805, %v804
        %v820 = vpack.c.b16 %v807, %v806
        %v821 = vpack.c.b16 %v809, %v808
        %v822 = vpack.c.b16 %v811, %v810
        %v823 = vpack.c.b16 %v813, %v812
        %v824 = vpack.c.b16 %v815, %v814
        %v825 = vpack.c.b16 %v817, %v816
        %v850 = vunpack.c.l.b16 %v770
        %v851 = vunpack.c.l.b16 %v771
        %v852 = vunpack.c.l.b16 %v772
        %v853 = vunpack.c.l.b16 %v773
        %v854 = vunpack.c.l.b16 %v774
        %v855 = vunpack.c.l.b16 %v775
        %v856 = vunpack.c.l.b16 %v776
        %v857 = vunpack.c.l.b16 %v777
        %v858 = vunpack.c.l.b16 %v778
        %v859 = vunpack.c.l.b16 %v779
        %v860 = vunpack.c.l.b16 %v780
        %v861 = vunpack.c.l.b16 %v781
        %v862 = vunpack.c.l.b16 %v782
        %v863 = vunpack.c.l.b16 %v783
        %v864 = vunpack.c.l.b16 %v784
        %v865 = vunpack.c.l.b16 %v785
        %v866 = vpack.c.b16 %v851, %v850
        %v867 = vpack.c.b16 %v853, %v852
        %v868 = vpack.c.b16 %v855, %v854
        %v869 = vpack.c.b16 %v857, %v856
        %v870 = vpack.c.b16 %v859, %v858
        %v871 = vpack.c.b16 %v861, %v860
        %v872 = vpack.c.b16 %v863, %v862
        %v873 = vpack.c.b16 %v865, %v864
        %v882 = vld [vmem:[#allocation3] sm:$0xff]
        %v883 = vld [vmem:[#allocation3 + $0x8] sm:$0xff]
        %v884 = vld [vmem:[#allocation3 + $0x10] sm:$0xff]
        %v885 = vld [vmem:[#allocation3 + $0x18] sm:$0xff]
        %v886 = vld [vmem:[#allocation3 + $0x20] sm:$0xff]
        %v887 = vld [vmem:[#allocation3 + $0x28] sm:$0xff]
        %v888 = vld [vmem:[#allocation3 + $0x30] sm:$0xff]
        %v889 = vld [vmem:[#allocation3 + $0x38] sm:$0xff]
        %v890 = vld [vmem:[#allocation3 + $0x40] sm:$0xff]
        %v891 = vld [vmem:[#allocation3 + $0x48] sm:$0xff]
        %v892 = vld [vmem:[#allocation3 + $0x50] sm:$0xff]
        %v893 = vld [vmem:[#allocation3 + $0x58] sm:$0xff]
        %v894 = vld [vmem:[#allocation3 + $0x60] sm:$0xff]
        %v895 = vld [vmem:[#allocation3 + $0x68] sm:$0xff]
        %v896 = vld [vmem:[#allocation3 + $0x70] sm:$0xff]
        %v897 = vld [vmem:[#allocation3 + $0x78] sm:$0xff]
        %v898 = vld [vmem:[%s347] sm:$0xf]
        %v899 = vld [vmem:[%s347 + $0x4] sm:$0xf]
        %v900 = vld [vmem:[%s347 + $0x8] sm:$0xf]
        %v901 = vld [vmem:[%s347 + $0xc] sm:$0xf]
        %v902 = vld [vmem:[%s347 + $0x10] sm:$0xf]
        %v903 = vld [vmem:[%s347 + $0x14] sm:$0xf]
        %v904 = vld [vmem:[%s347 + $0x18] sm:$0xf]
        %v905 = vld [vmem:[%s347 + $0x1c] sm:$0xf]
        %v906 = vld [vmem:[%s347 + $0x20] sm:$0xf]
        %v907 = vld [vmem:[%s347 + $0x24] sm:$0xf]
        %v908 = vld [vmem:[%s347 + $0x28] sm:$0xf]
        %v909 = vld [vmem:[%s347 + $0x2c] sm:$0xf]
        %v910 = vld [vmem:[%s347 + $0x30] sm:$0xf]
        %v911 = vld [vmem:[%s347 + $0x34] sm:$0xf]
        %v912 = vld [vmem:[%s347 + $0x38] sm:$0xf]
        %v913 = vld [vmem:[%s347 + $0x3c] sm:$0xf]
        %v914 = vld [vmem:[%s347 + $0x40] sm:$0xf]
        %v915 = vld [vmem:[%s347 + $0x44] sm:$0xf]
        %v916 = vld [vmem:[%s347 + $0x48] sm:$0xf]
        %v917 = vld [vmem:[%s347 + $0x4c] sm:$0xf]
        %v918 = vld [vmem:[%s347 + $0x50] sm:$0xf]
        %v919 = vld [vmem:[%s347 + $0x54] sm:$0xf]
        %v920 = vld [vmem:[%s347 + $0x58] sm:$0xf]
        %v921 = vld [vmem:[%s347 + $0x5c] sm:$0xf]
        %v922 = vld [vmem:[%s347 + $0x60] sm:$0xf]
        %v923 = vld [vmem:[%s347 + $0x64] sm:$0xf]
        %v924 = vld [vmem:[%s347 + $0x68] sm:$0xf]
        %v925 = vld [vmem:[%s347 + $0x6c] sm:$0xf]
        %v926 = vld [vmem:[%s347 + $0x70] sm:$0xf]
        %v927 = vld [vmem:[%s347 + $0x74] sm:$0xf]
        %v928 = vld [vmem:[%s347 + $0x78] sm:$0xf]
        %v929 = vld [vmem:[%s347 + $0x7c] sm:$0xf]
        %v962 = vunpack.c.l.b16 %v898
        %v963 = vunpack.c.l.b16 %v899
        %v964 = vunpack.c.l.b16 %v900
        %v965 = vunpack.c.l.b16 %v901
        %v966 = vunpack.c.l.b16 %v902
        %v967 = vunpack.c.l.b16 %v903
        %v968 = vunpack.c.l.b16 %v904
        %v969 = vunpack.c.l.b16 %v905
        %v970 = vunpack.c.l.b16 %v906
        %v971 = vunpack.c.l.b16 %v907
        %v972 = vunpack.c.l.b16 %v908
        %v973 = vunpack.c.l.b16 %v909
        %v974 = vunpack.c.l.b16 %v910
        %v975 = vunpack.c.l.b16 %v911
        %v976 = vunpack.c.l.b16 %v912
        %v977 = vunpack.c.l.b16 %v913
        %v978 = vunpack.c.l.b16 %v914
        %v979 = vunpack.c.l.b16 %v915
        %v980 = vunpack.c.l.b16 %v916
        %v981 = vunpack.c.l.b16 %v917
        %v982 = vunpack.c.l.b16 %v918
        %v983 = vunpack.c.l.b16 %v919
        %v984 = vunpack.c.l.b16 %v920
        %v985 = vunpack.c.l.b16 %v921
        %v986 = vunpack.c.l.b16 %v922
        %v987 = vunpack.c.l.b16 %v923
        %v988 = vunpack.c.l.b16 %v924
        %v989 = vunpack.c.l.b16 %v925
        %v990 = vunpack.c.l.b16 %v926
        %v991 = vunpack.c.l.b16 %v927
        %v992 = vunpack.c.l.b16 %v928
        %v993 = vunpack.c.l.b16 %v929
        %v994 = vpack.c.b16 %v963, %v962
        %v995 = vpack.c.b16 %v965, %v964
        %v996 = vpack.c.b16 %v967, %v966
        %v997 = vpack.c.b16 %v969, %v968
        %v998 = vpack.c.b16 %v971, %v970
        %v999 = vpack.c.b16 %v973, %v972
        %v1000 = vpack.c.b16 %v975, %v974
        %v1001 = vpack.c.b16 %v977, %v976
        %v1002 = vpack.c.b16 %v979, %v978
        %v1003 = vpack.c.b16 %v981, %v980
        %v1004 = vpack.c.b16 %v983, %v982
        %v1005 = vpack.c.b16 %v985, %v984
        %v1006 = vpack.c.b16 %v987, %v986
        %v1007 = vpack.c.b16 %v989, %v988
        %v1008 = vpack.c.b16 %v991, %v990
        %v1009 = vpack.c.b16 %v993, %v992
        %1026 = vmatprep.subr.bf16.mxu0 0
        %1027 = vmatpush1.bf16.msra.mxu0 %v994
        %1028 = vmatprep.subr.bf16.mxu0 0
        %1029 = vmatpush1.bf16.msra.mxu0 %v995
        %1030 = vmatprep.subr.bf16.mxu0 0
        %1031 = vmatpush1.bf16.msra.mxu0 %v996
        %1032 = vmatprep.subr.bf16.mxu0 0
        %1033 = vmatpush1.bf16.msra.mxu0 %v997
        %1034 = vmatprep.subr.bf16.mxu0 0
        %1035 = vmatpush1.bf16.msra.mxu0 %v998
        %1036 = vmatprep.subr.bf16.mxu0 0
        %1037 = vmatpush1.bf16.msra.mxu0 %v999
        %1038 = vmatprep.subr.bf16.mxu0 0
        %1039 = vmatpush1.bf16.msra.mxu0 %v1000
        %1040 = vmatprep.subr.bf16.mxu0 0
        %1041 = vmatpush1.bf16.msra.mxu0 %v1001
        %1042 = vmatprep.subr.bf16.mxu0 0
        %1043 = vmatpush1.bf16.msra.mxu0 %v1002
        %1044 = vmatprep.subr.bf16.mxu0 0
        %1045 = vmatpush1.bf16.msra.mxu0 %v1003
        %1046 = vmatprep.subr.bf16.mxu0 0
        %1047 = vmatpush1.bf16.msra.mxu0 %v1004
        %1048 = vmatprep.subr.bf16.mxu0 0
        %1049 = vmatpush1.bf16.msra.mxu0 %v1005
        %1050 = vmatprep.subr.bf16.mxu0 0
        %1051 = vmatpush1.bf16.msra.mxu0 %v1006
        %1052 = vmatprep.subr.bf16.mxu0 0
        %1053 = vmatpush1.bf16.msra.mxu0 %v1007
        %1054 = vmatprep.subr.bf16.mxu0 0
        %1055 = vmatpush1.bf16.msra.mxu0 %v1008
        %1056 = vmatprep.subr.bf16.mxu0 0
        %1057 = vmatpush1.bf16.msra.mxu0 %v1009
        %1058 = vmatprep.mubr.bf16.mxu0 %v866
        %1059 = vmatmul.mubr.bf16.gmra.mrb[0].mxu0 %v818
        %v1060 = vpop.f32.mrb[0].mxu0
        %v1061 = vadd.f32 0.0, %v1060
        %v1062 = vpop.f32.mrb[0].mxu0
        %v1063 = vpop.f32.mrb[0].mxu0
        %v1064 = vadd.f32 0.0, %v1063
        %v1065 = vpop.f32.mrb[0].mxu0
        %1066 = vmatprep.mubr.bf16.mxu0 %v867
        %1067 = vmatmul.mubr.bf16.gmra.mrb[0].mxu0 %v819
        %v1068 = vpop.f32.mrb[0].mxu0
        %v1069 = vadd.f32 0.0, %v1068
        %v1070 = vpop.f32.mrb[0].mxu0
        %v1071 = vpop.f32.mrb[0].mxu0
        %v1072 = vadd.f32 0.0, %v1071
        %v1073 = vpop.f32.mrb[0].mxu0
        %1074 = vmatprep.mubr.bf16.mxu0 %v868
        %1075 = vmatmul.mubr.bf16.gmra.mrb[0].mxu0 %v820
        %v1076 = vpop.f32.mrb[0].mxu0
        %v1077 = vadd.f32 0.0, %v1076
        %v1078 = vpop.f32.mrb[0].mxu0
        %v1079 = vpop.f32.mrb[0].mxu0
        %v1080 = vadd.f32 0.0, %v1079
        %v1081 = vpop.f32.mrb[0].mxu0
        %1082 = vmatprep.mubr.bf16.mxu0 %v869
        %1083 = vmatmul.mubr.bf16.gmra.mrb[0].mxu0 %v821
        %v1084 = vpop.f32.mrb[0].mxu0
        %v1085 = vadd.f32 0.0, %v1084
        %v1086 = vpop.f32.mrb[0].mxu0
        %v1087 = vpop.f32.mrb[0].mxu0
        %v1088 = vadd.f32 0.0, %v1087
        %v1089 = vpop.f32.mrb[0].mxu0
        %1090 = vmatprep.mubr.bf16.mxu0 %v870
        %1091 = vmatmul.mubr.bf16.gmra.mrb[0].mxu0 %v822
        %v1092 = vpop.f32.mrb[0].mxu0
        %v1093 = vadd.f32 0.0, %v1092
        %v1094 = vpop.f32.mrb[0].mxu0
        %v1095 = vpop.f32.mrb[0].mxu0
        %v1096 = vadd.f32 0.0, %v1095
        %v1097 = vpop.f32.mrb[0].mxu0
        %1098 = vmatprep.mubr.bf16.mxu0 %v871
        %1099 = vmatmul.mubr.bf16.gmra.mrb[0].mxu0 %v823
        %v1100 = vpop.f32.mrb[0].mxu0
        %v1101 = vadd.f32 0.0, %v1100
        %v1102 = vpop.f32.mrb[0].mxu0
        %v1103 = vpop.f32.mrb[0].mxu0
        %v1104 = vadd.f32 0.0, %v1103
        %v1105 = vpop.f32.mrb[0].mxu0
        %1106 = vmatprep.mubr.bf16.mxu0 %v872
        %1107 = vmatmul.mubr.bf16.gmra.mrb[0].mxu0 %v824
        %v1108 = vpop.f32.mrb[0].mxu0
        %v1109 = vadd.f32 0.0, %v1108
        %v1110 = vpop.f32.mrb[0].mxu0
        %v1111 = vpop.f32.mrb[0].mxu0
        %v1112 = vadd.f32 0.0, %v1111
        %v1113 = vpop.f32.mrb[0].mxu0
        %1114 = vmatprep.mubr.bf16.mxu0 %v873
        %1115 = vmatmul.mubr.bf16.gmra.mrb[0].mxu0 %v825
        %v1116 = vpop.f32.mrb[0].mxu0
        %v1117 = vadd.f32 0.0, %v1116
        %v1118 = vpop.f32.mrb[0].mxu0
        %v1119 = vpop.f32.mrb[0].mxu0
        %v1120 = vadd.f32 0.0, %v1119
        %v1121 = vpop.f32.mrb[0].mxu0
        %1122 = vdwg.mxu0
        %v1123 = vadd.f32 %v882, %v1061
        %v1124 = vadd.f32 %v883, %v1064
        %v1125 = vadd.f32 %v884, %v1069
        %v1126 = vadd.f32 %v885, %v1072
        %v1127 = vadd.f32 %v886, %v1077
        %v1128 = vadd.f32 %v887, %v1080
        %v1129 = vadd.f32 %v888, %v1085
        %v1130 = vadd.f32 %v889, %v1088
        %v1131 = vadd.f32 %v890, %v1093
        %v1132 = vadd.f32 %v891, %v1096
        %v1133 = vadd.f32 %v892, %v1101
        %v1134 = vadd.f32 %v893, %v1104
        %v1135 = vadd.f32 %v894, %v1109
        %v1136 = vadd.f32 %v895, %v1112
        %v1137 = vadd.f32 %v896, %v1117
        %v1138 = vadd.f32 %v897, %v1120
        %1139 = vst [vmem:[#allocation3] sm:$0xff] %v1123
        %1140 = vst [vmem:[#allocation3 + $0x8] sm:$0xff] %v1124
        %1141 = vst [vmem:[#allocation3 + $0x10] sm:$0xff] %v1125
        %1142 = vst [vmem:[#allocation3 + $0x18] sm:$0xff] %v1126
        %1143 = vst [vmem:[#allocation3 + $0x20] sm:$0xff] %v1127
        %1144 = vst [vmem:[#allocation3 + $0x28] sm:$0xff] %v1128
        %1145 = vst [vmem:[#allocation3 + $0x30] sm:$0xff] %v1129
        %1146 = vst [vmem:[#allocation3 + $0x38] sm:$0xff] %v1130
        %1147 = vst [vmem:[#allocation3 + $0x40] sm:$0xff] %v1131
        %1148 = vst [vmem:[#allocation3 + $0x48] sm:$0xff] %v1132
        %1149 = vst [vmem:[#allocation3 + $0x50] sm:$0xff] %v1133
        %1150 = vst [vmem:[#allocation3 + $0x58] sm:$0xff] %v1134
        %1151 = vst [vmem:[#allocation3 + $0x60] sm:$0xff] %v1135
        %1152 = vst [vmem:[#allocation3 + $0x68] sm:$0xff] %v1136
        %1153 = vst [vmem:[#allocation3 + $0x70] sm:$0xff] %v1137
        %1154 = vst [vmem:[#allocation3 + $0x78] sm:$0xff] %v1138
        %p1155 = scmp.eq.s32.totalorder %s24, 2
        // Predicated region
        $region77: #{tpu_custom_call.1} parent=55 // pred_check
          %p1156 = pneg %p1155
        $region78: #{tpu_custom_call.1} parent=55 // pred_check_branch
          %1158 = sbr.rel (%p1156) target = $region80
        $region79: #{tpu_custom_call.1} parent=55 // pred_region
          %v1159 = vld [vmem:[#allocation3] sm:$0xff]
          %v1160 = vld [vmem:[#allocation3 + $0x8] sm:$0xff]
          %v1161 = vld [vmem:[#allocation3 + $0x10] sm:$0xff]
          %v1162 = vld [vmem:[#allocation3 + $0x18] sm:$0xff]
          %v1163 = vld [vmem:[#allocation3 + $0x20] sm:$0xff]
          %v1164 = vld [vmem:[#allocation3 + $0x28] sm:$0xff]
          %v1165 = vld [vmem:[#allocation3 + $0x30] sm:$0xff]
          %v1166 = vld [vmem:[#allocation3 + $0x38] sm:$0xff]
          %v1167 = vld [vmem:[#allocation3 + $0x40] sm:$0xff]
          %v1168 = vld [vmem:[#allocation3 + $0x48] sm:$0xff]
          %v1169 = vld [vmem:[#allocation3 + $0x50] sm:$0xff]
          %v1170 = vld [vmem:[#allocation3 + $0x58] sm:$0xff]
          %v1171 = vld [vmem:[#allocation3 + $0x60] sm:$0xff]
          %v1172 = vld [vmem:[#allocation3 + $0x68] sm:$0xff]
          %v1173 = vld [vmem:[#allocation3 + $0x70] sm:$0xff]
          %v1174 = vld [vmem:[#allocation3 + $0x78] sm:$0xff]
          %v1175 = vmax.f32 %v1159, %v1167
          %v1176 = vmax.f32 %v1160, %v1168
          %v1177 = vmax.f32 %v1161, %v1169
          %v1178 = vmax.f32 %v1162, %v1170
          %v1179 = vmax.f32 %v1163, %v1171
          %v1180 = vmax.f32 %v1164, %v1172
          %v1181 = vmax.f32 %v1165, %v1173
          %v1182 = vmax.f32 %v1166, %v1174
          %v1183 = vmax.f32 %v1175, %v1179
          %v1184 = vmax.f32 %v1176, %v1180
          %v1185 = vmax.f32 %v1177, %v1181
          %v1186 = vmax.f32 %v1178, %v1182
          %v1187 = vmax.f32 %v1183, %v1185
          %v1188 = vmax.f32 %v1184, %v1186
          %v1189 = vmax.f32 %v1187, %v1188
          %v1190 = vmax.f32 %v1189, 0.0
          %v1191 = vpack.c.bf16 %v1190, %v1190
          %v1192 = vld [vmem:[#allocation10] sm:$0xf]
          %v1193 = vld [vmem:[#allocation10 + $0x4] sm:$0xf]
          %v1194 = vld [vmem:[#allocation10 + $0x8] sm:$0xf]
          %v1195 = vld [vmem:[#allocation10 + $0xc] sm:$0xf]
          %v1196 = vld [vmem:[#allocation10 + $0x10] sm:$0xf]
          %v1197 = vld [vmem:[#allocation10 + $0x14] sm:$0xf]
          %v1198 = vld [vmem:[#allocation10 + $0x18] sm:$0xf]
          %v1199 = vld [vmem:[#allocation10 + $0x1c] sm:$0xf]
          %v1200 = vld [vmem:[#allocation10 + $0x20] sm:$0xf]
          %v1201 = vld [vmem:[#allocation10 + $0x24] sm:$0xf]
          %v1202 = vld [vmem:[#allocation10 + $0x28] sm:$0xf]
          %v1203 = vld [vmem:[#allocation10 + $0x2c] sm:$0xf]
          %v1204 = vld [vmem:[#allocation10 + $0x30] sm:$0xf]
          %v1205 = vld [vmem:[#allocation10 + $0x34] sm:$0xf]
          %v1206 = vld [vmem:[#allocation10 + $0x38] sm:$0xf]
          %v1207 = vld [vmem:[#allocation10 + $0x3c] sm:$0xf]
          %v1208 = vld [vmem:[%s6] sm:$0x1]
          %v1210 = vlaneseq
          %v1211 = vshrl.u32 %v1210, 7
          %v1212 = vsub.s32 0, %v1211
          %v1213 = vrot.slane %v1208, %v1212
          %v1231 = vunpack.c.l.b16 %v1192
          %v1232 = vunpack.c.l.b16 %v1193
          %v1233 = vunpack.c.l.b16 %v1194
          %v1234 = vunpack.c.l.b16 %v1195
          %v1235 = vunpack.c.l.b16 %v1196
          %v1236 = vunpack.c.l.b16 %v1197
          %v1237 = vunpack.c.l.b16 %v1198
          %v1238 = vunpack.c.l.b16 %v1199
          %v1239 = vunpack.c.l.b16 %v1200
          %v1240 = vunpack.c.l.b16 %v1201
          %v1241 = vunpack.c.l.b16 %v1202
          %v1242 = vunpack.c.l.b16 %v1203
          %v1243 = vunpack.c.l.b16 %v1204
          %v1244 = vunpack.c.l.b16 %v1205
          %v1245 = vunpack.c.l.b16 %v1206
          %v1246 = vunpack.c.l.b16 %v1207
          %v1247 = vpack.c.b16 %v1232, %v1231
          %v1248 = vpack.c.b16 %v1234, %v1233
          %v1249 = vpack.c.b16 %v1236, %v1235
          %v1250 = vpack.c.b16 %v1238, %v1237
          %v1251 = vpack.c.b16 %v1240, %v1239
          %v1252 = vpack.c.b16 %v1242, %v1241
          %v1253 = vpack.c.b16 %v1244, %v1243
          %v1254 = vpack.c.b16 %v1246, %v1245
          %1263 = vmatprep.subr.bf16.mxu0 0
          %1264 = vmatpush1.bf16.msra.mxu0 %v1247
          %1265 = vmatprep.subr.bf16.mxu0 0
          %1266 = vmatpush1.bf16.msra.mxu0 %v1248
          %1267 = vmatprep.subr.bf16.mxu0 0
          %1268 = vmatpush1.bf16.msra.mxu0 %v1249
          %1269 = vmatprep.subr.bf16.mxu0 0
          %1270 = vmatpush1.bf16.msra.mxu0 %v1250
          %1271 = vmatprep.subr.bf16.mxu0 0
          %1272 = vmatpush1.bf16.msra.mxu0 %v1251
          %1273 = vmatprep.subr.bf16.mxu0 0
          %1274 = vmatpush1.bf16.msra.mxu0 %v1252
          %1275 = vmatprep.subr.bf16.mxu0 0
          %1276 = vmatpush1.bf16.msra.mxu0 %v1253
          %1277 = vmatprep.subr.bf16.mxu0 0
          %1278 = vmatpush1.bf16.msra.mxu0 %v1254
          %1279 = vmatprep.subr.bf16.mxu0 0
          %1280 = vmatpush1.bf16.msra.mxu0 0
          %1281 = vmatprep.subr.bf16.mxu0 0
          %1282 = vmatpush1.bf16.msra.mxu0 0
          %1283 = vmatprep.subr.bf16.mxu0 0
          %1284 = vmatpush1.bf16.msra.mxu0 0
          %1285 = vmatprep.subr.bf16.mxu0 0
          %1286 = vmatpush1.bf16.msra.mxu0 0
          %1287 = vmatprep.subr.bf16.mxu0 0
          %1288 = vmatpush1.bf16.msra.mxu0 0
          %1289 = vmatprep.subr.bf16.mxu0 0
          %1290 = vmatpush1.bf16.msra.mxu0 0
          %1291 = vmatprep.subr.bf16.mxu0 0
          %1292 = vmatpush1.bf16.msra.mxu0 0
          %1293 = vmatprep.subr.bf16.mxu0 0
          %1294 = vmatpush1.bf16.msra.mxu0 0
          %1295 = vmatprep.mubr.bf16.mxu0 0
          %1296 = vmatmul.mubr.bf16.gmra.mrb[0].mxu0 %v1191
          %v1297 = vpop.f32.mrb[0].mxu0
          %v1298 = vadd.f32 %v1213, %v1297
          %v1299 = vpop.f32.mrb[0].mxu0
          %v1300 = vpop.f32.mrb[0].mxu0
          %v1301 = vpop.f32.mrb[0].mxu0
          %1302 = vdwg.mxu0
          %v1303 = vmax.f32 %v1298, 0.0
          %v1304 = vld [vmem:[%s7] sm:$0x1]
          %v1306 = vlaneseq
          %v1307 = vshrl.u32 %v1306, 7
          %v1308 = vsub.s32 0, %v1307
          %v1309 = vrot.slane %v1304, %v1308
          %v1311 = vmul.f32 %v1303, %v1309
          %1312 = vadd.xlane.f32.xlu0 %v1311
          %v1313 = vpop.xlane.xlu0 %1312
          %v1314 = vld [vmem:[#allocation4] sm:$0x1]
          %v1316 = vlaneseq
          %v1317 = vshrl.u32 %v1316, 7
          %v1318 = vsub.s32 0, %v1317
          %v1319 = vrot.slane %v1314, %v1318
          %v1321 = vadd.f32 %v1313, %v1319
          %vm1322 = vcmask 7168
          %1323 = vst.msk [vmem:[%s9] sm:$0xff] %vm1322, %v1321
        $region80: #{tpu_custom_call.1} parent=55 // pred_fallthru
          _
        // Predicated region
        $region81: #{tpu_custom_call.1} parent=55 // pred_check
          %p1324 = pneg %p231
        $region82: #{tpu_custom_call.1} parent=55 // pred_check_branch
          %1326 = sbr.rel (%p1324) target = $region84
        $region83: #{tpu_custom_call.1} parent=55 // pred_region
          _
        $region84: #{tpu_custom_call.1} parent=55 // pred_fallthru
          _
        // Predicated region
        $region85: #{tpu_custom_call.1} parent=55 // pred_check
          %p1327 = pneg %p231
        $region86: #{tpu_custom_call.1} parent=55 // pred_check_branch
          %1329 = sbr.rel (%p1327) target = $region88
        $region87: #{tpu_custom_call.1} parent=55 // pred_region
          _
        $region88: #{tpu_custom_call.1} parent=55 // pred_fallthru
          _
      $region56: #{tpu_custom_call.1} parent=5 // pred_fallthru
        _
      %p1330 = scmp.le.s32.totalorder 2, %s19
      // Predicated region
      $region89: #{tpu_custom_call.1} parent=5 // pred_check
        %p1331 = pneg %p1330
      $region90: #{tpu_custom_call.1} parent=5 // pred_check_branch
        %1333 = sbr.rel (%p1331) target = $region92
      $region91: #{tpu_custom_call.1} parent=5 // pred_region
        %s1334 = ssub.s32 %s19, 2
      $region92: #{tpu_custom_call.1} parent=5 // pred_fallthru
        _
    $region6: #{tpu_custom_call.1} parent=1 // loop_footer
      %s23 = sadd.s32 1, %s19
    $region7: #{tpu_custom_call.1} parent=1 // loop_footer_branch
      %18 = sbr.rel target = $region3
    $region8: #{tpu_custom_call.1} parent=1 // loop_exit
      _
    %1335 = vsyncpa [#allocation6], 1
    %s1336 = scalar_lea.sflag [#allocation6], 1
    %1337 = vsyncpa %s1336, 1
    %1338 = vsyncpa [#allocation8], 1

</llo_original>
